<compile_context>
chip_gen: v7x
topology: tpu7x:2x2x1
jax: 0.10.0
libtpu: 0.0.40
codegen_flags: <defaults>
</compile_context>

<pallas_src>
import functools

import jax
import jax.numpy as jnp
from jax.experimental import pallas as pl
from jax.experimental.pallas import tpu as pltpu

EPS = 1e-5                     # BatchNorm1d default eps

_VMEM_LIMIT = None


def _vmem_limit():
    """Per-generation scoped-VMEM budget: ~75% of physical, capped at 100 MiB."""
    global _VMEM_LIMIT
    if _VMEM_LIMIT is None:
        try:
            cap = int(pltpu.get_tpu_info().vmem_capacity_bytes)
        except Exception:       # conservative fallback (v7x-sized)
            cap = 64 * 1024 * 1024
        _VMEM_LIMIT = min((cap * 3) // 4, 100 * 1024 * 1024)
    return _VMEM_LIMIT


def _round_up(x, m):
    return (x + m - 1) // m * m


def _pad2d(a, rows, cols):
    out = jnp.zeros((rows, cols), jnp.float32)
    return out.at[: a.shape[0], : a.shape[1]].set(a)


# ----------------------------------------------------------------------------
# Kernel 1a/1b: CustomConvLayer message + scatter-add.
# Grid = (core_split, edge_tiles); edge axis is the reduction ("arbitrary"),
# the core-split axis is "parallel" (v7x megacore). The [N_pad, H_pad] f32
# accumulator is a VMEM scratch; the bf16 partial is written only in the
# last-edge-tile epilogue.
# ----------------------------------------------------------------------------
def _conv1_scatter_kernel(ef_ref, w1_ref, bias_ref, w2_ref, s_ref, out_ref, acc_ref):
    e = pl.program_id(1)

    @pl.when(e == 0)
    def _():
        acc_ref[...] = jnp.zeros_like(acc_ref)

    # message MLP: Linear([x_i | x_j | dpos]) -> ReLU -> Linear   (bf16 in, f32 acc)
    h = jnp.dot(ef_ref[...], w1_ref[...], preferred_element_type=jnp.float32)
    h = jnp.maximum(h + bias_ref[0:1, :], 0.0)
    msg = (jnp.dot(h.astype(jnp.bfloat16), w2_ref[...],
                   preferred_element_type=jnp.float32) + bias_ref[1:2, :])
    # aggr='add': one-hot scatter matmul on the MXU (S is bf16/exact 0-1)
    acc_ref[...] += jnp.dot(s_ref[...], msg.astype(jnp.bfloat16),
                            preferred_element_type=jnp.float32)

    @pl.when(e == pl.num_programs(1) - 1)
    def _():
        out_ref[...] = acc_ref[...].astype(out_ref.dtype)


def _conv2_scatter_kernel(he_ref, bias_ref, w2_ref, s_ref, out_ref, acc_ref):
    e = pl.program_id(1)

    @pl.when(e == 0)
    def _():
        acc_ref[...] = jnp.zeros_like(acc_ref)

    # first Linear + ReLU already applied at the node level / in the wrapper;
    # only the second Linear and the scatter remain per edge.
    msg = (jnp.dot(he_ref[...], w2_ref[...],
                   preferred_element_type=jnp.float32) + bias_ref[0:1, :])
    acc_ref[...] += jnp.dot(s_ref[...], msg.astype(jnp.bfloat16),
                            preferred_element_type=jnp.float32)

    @pl.when(e == pl.num_programs(1) - 1)
    def _():
        out_ref[...] = acc_ref[...].astype(out_ref.dtype)


def conv_scatter(edge_in, w1, bias, w2, scatter, *, n_pad, h_pad, tile_e, nc):
    """Edge-tiled message + scatter-add -> bf16 partial sums [nc, N_pad, H_pad]."""
    e_pad, k = edge_in.shape
    assert e_pad % tile_e == 0
    tiles = e_pad // tile_e
    assert tiles % nc == 0
    tpc = tiles // nc                    # edge tiles per core split

    def full(shape):
        return pl.BlockSpec(shape, lambda c, e: (0, 0))

    in_specs = [pl.BlockSpec((tile_e, k), lambda c, e: (c * tpc + e, 0))]
    args = [edge_in]
    kernel = _conv2_scatter_kernel
    if w1 is not None:
        in_specs.append(full(w1.shape))
        args.append(w1)
        kernel = _conv1_scatter_kernel
    in_specs += [full((8, h_pad)),                                    # packed b1/b2
                 full((h_pad, h_pad)),                                # W2
                 pl.BlockSpec((n_pad, tile_e), lambda c, e: (0, c * tpc + e))]
    args += [bias, w2, scatter]

    return pl.pallas_call(
        kernel,
        out_shape=jax.ShapeDtypeStruct((nc, n_pad, h_pad), jnp.bfloat16),
        grid=(nc, tpc),
        in_specs=in_specs,
        out_specs=pl.BlockSpec((None, n_pad, h_pad), lambda c, e: (c, 0, 0)),
        scratch_shapes=[pltpu.VMEM((n_pad, h_pad), jnp.float32)],
        compiler_params=pltpu.CompilerParams(
            dimension_semantics=("parallel", "arbitrary"),
            vmem_limit_bytes=_vmem_limit()),
    )(*args)


# ----------------------------------------------------------------------------
# Shared epilogue math: combine per-core partials, BatchNorm1d (training,
# biased variance over valid nodes) + ReLU, padded rows masked to 0.
# ----------------------------------------------------------------------------
def _combine_bn_relu(p_ref, bn_ref, nc, n_valid):
    acc = p_ref[0].astype(jnp.float32)
    for c in range(1, nc):
        acc = acc + p_ref[c].astype(jnp.float32)
    n_pad = acc.shape[0]
    row = jax.lax.broadcasted_iota(jnp.int32, (n_pad, 1), 0)
    mask = row < n_valid
    inv_n = 1.0 / float(n_valid)
    mean = jnp.sum(jnp.where(mask, acc, 0.0), axis=0, keepdims=True) * inv_n
    cent = acc - mean
    var = jnp.sum(jnp.where(mask, cent * cent, 0.0), axis=0, keepdims=True) * inv_n
    h = cent * jax.lax.rsqrt(var + EPS) * bn_ref[0:1, :] + bn_ref[1:2, :]
    return jnp.where(mask, jnp.maximum(h, 0.0), 0.0)


# ----------------------------------------------------------------------------
# Kernel 2: BN1 + ReLU epilogue, fused with conv2's first Linear hoisted to
# the node level (outputs hA = h @ W1a, hB = h @ W1b as bf16).
# TODO(synk): tile over node blocks for graphs that don't fit one VMEM block.
# ----------------------------------------------------------------------------
def _node_epilogue_kernel(p_ref, bn_ref, wa_ref, wb_ref, ha_ref, hb_ref,
                          *, n_valid, nc):
    h = _combine_bn_relu(p_ref, bn_ref, nc, n_valid).astype(jnp.bfloat16)
    ha_ref[...] = jnp.dot(h, wa_ref[...],
                          preferred_element_type=jnp.float32).astype(ha_ref.dtype)
    hb_ref[...] = jnp.dot(h, wb_ref[...],
                          preferred_element_type=jnp.float32).astype(hb_ref.dtype)


def node_epilogue(parts, bn, w1a, w1b, *, n_valid):
    nc, n_pad, h_pad = parts.shape
    vmem = pl.BlockSpec(memory_space=pltpu.MemorySpace.VMEM)
    kernel = functools.partial(_node_epilogue_kernel, n_valid=n_valid, nc=nc)
    return pl.pallas_call(
        kernel,
        out_shape=(jax.ShapeDtypeStruct((n_pad, h_pad), jnp.bfloat16),
                   jax.ShapeDtypeStruct((n_pad, h_pad), jnp.bfloat16)),
        in_specs=[vmem] * 4,
        out_specs=(vmem, vmem),
        compiler_params=pltpu.CompilerParams(vmem_limit_bytes=_vmem_limit()),
    )(parts, bn, w1a, w1b)


# ----------------------------------------------------------------------------
# Kernel 3: BN2 + ReLU + global_add_pool (one-hot matmul) + PyG MLP predictor
#   Linear(H->H, bias=False) -> BatchNorm1d -> ReLU -> Linear(H->O, bias=True)
# TODO(synk): block over node tiles (resident pooled accumulator) for large N.
# ----------------------------------------------------------------------------
def _pool_predict_kernel(p_ref, pool_ref, bn2_ref, w1_ref, pbn_ref, w2_ref, b2_ref,
                         o_ref, *, n_valid, g_valid, nc):
    h2 = _combine_bn_relu(p_ref, bn2_ref, nc, n_valid).astype(jnp.bfloat16)
    pooled = jnp.dot(pool_ref[...], h2, preferred_element_type=jnp.float32)   # [G_pad,H]
    hp = jnp.dot(pooled.astype(jnp.bfloat16), w1_ref[...],
                 preferred_element_type=jnp.float32)                          # bias=False
    g_pad = hp.shape[0]
    grow = jax.lax.broadcasted_iota(jnp.int32, (g_pad, 1), 0)
    gmask = grow < g_valid
    inv_g = 1.0 / float(g_valid)
    gm = jnp.sum(jnp.where(gmask, hp, 0.0), axis=0, keepdims=True) * inv_g
    gc = hp - gm
    gv = jnp.sum(jnp.where(gmask, gc * gc, 0.0), axis=0, keepdims=True) * inv_g
    hn = gc * jax.lax.rsqrt(gv + EPS) * pbn_ref[0:1, :] + pbn_ref[1:2, :]
    hn = jnp.maximum(hn, 0.0)
    o_ref[...] = (jnp.dot(hn.astype(jnp.bfloat16), w2_ref[...],
                          preferred_element_type=jnp.float32) + b2_ref[...])


def pool_predict(parts, pool, bn2, w1, pbn, w2, b2, *, n_valid, g_valid):
    nc = parts.shape[0]
    g_pad = pool.shape[0]
    out_pad = w2.shape[1]
    vmem = pl.BlockSpec(memory_space=pltpu.MemorySpace.VMEM)
    kernel = functools.partial(_pool_predict_kernel, n_valid=n_valid,
                               g_valid=g_valid, nc=nc)
    return pl.pallas_call(
        kernel,
        out_shape=jax.ShapeDtypeStruct((g_pad, out_pad), jnp.float32),
        in_specs=[vmem] * 7,
        out_specs=vmem,
        compiler_params=pltpu.CompilerParams(vmem_limit_bytes=_vmem_limit()),
    )(parts, pool, bn2, w1, pbn, w2, b2)


# ----------------------------------------------------------------------------
# Full forward pass (takes PADDED params, see pad_params)
# ----------------------------------------------------------------------------
def custom_gnn_forward(pp, x, pos, edge_index, batch, num_graphs, output_dim,
                       *, tile_e=512, num_core_splits=2):
    src, dst = edge_index[0], edge_index[1]     # j = source, i = target (PyG flow)
    n, e = x.shape[0], src.shape[0]
    h_pad = pp["c1_w2"].shape[0]
    n_pad = _round_up(n, 8)
    nc = num_core_splits
    tiles = _round_up(int(pl.cdiv(e, tile_e)), nc)
    e_pad = tiles * tile_e
    g_pad = _round_up(max(num_graphs, 8), 8)

    # --- plain-JAX glue: data-dependent gathers & one-hot scatter/pool matrices ---
    pad_e = e_pad - e
    zpad = jnp.zeros((pad_e,), src.dtype)
    src_p = jnp.concatenate([src, zpad])
    dst_p = jnp.concatenate([dst, zpad])
    # padded edges scatter to index -1 -> all-zero column -> contribute nothing
    scat_idx = jnp.concatenate([dst, jnp.full((pad_e,), -1, dst.dtype)])
    scatter = (jnp.arange(n_pad, dtype=jnp.int32)[:, None]
               == scat_idx[None, :].astype(jnp.int32)).astype(jnp.bfloat16)   # [N_pad,E_pad]
    batch_p = jnp.concatenate([batch, jnp.full((n_pad - n,), -1, batch.dtype)])
    pool = (jnp.arange(g_pad, dtype=jnp.int32)[:, None]
            == batch_p[None, :].astype(jnp.int32)).astype(jnp.bfloat16)       # [G_pad,N_pad]

    dpos = pos[src_p] - pos[dst_p]                                            # [E_pad, 3]

    # --- conv1: lane-packed [x_i | x_j | dpos] edge features, one K=8 matmul ------
    k1_pad = pp["c1_w1"].shape[0]
    ef = jnp.concatenate([x[dst_p], x[src_p], dpos], axis=-1)
    ef = jnp.pad(ef, ((0, 0), (0, k1_pad - ef.shape[1]))).astype(jnp.bfloat16)
    parts1 = conv_scatter(ef, pp["c1_w1"], pp["c1_bias"], pp["c1_w2"], scatter,
                          n_pad=n_pad, h_pad=h_pad, tile_e=tile_e, nc=nc)

    # --- BN1 + ReLU + conv2 first-Linear hoisted to the node level -----------------
    hA, hB = node_epilogue(parts1, pp["bn1"], pp["c2_w1a"], pp["c2_w1b"], n_valid=n)

    # --- conv2: per-edge hidden = ReLU(hA[dst] + hB[src] + dpos @ W1c + b1) --------
    pre = (hA[dst_p].astype(jnp.float32) + hB[src_p].astype(jnp.float32)
           + dpos @ pp["c2_w1c"] + pp["c2_b1"])
    h_edge = jnp.maximum(pre, 0.0).astype(jnp.bfloat16)                       # [E_pad,H_pad]
    parts2 = conv_scatter(h_edge, None, pp["c2_bias"], pp["c2_w2"], scatter,
                          n_pad=n_pad, h_pad=h_pad, tile_e=tile_e, nc=nc)

    # --- BN2 + ReLU + global_add_pool + predictor MLP (one fused kernel) ----------
    out = pool_predict(parts2, pool, pp["bn2"], pp["p_w1"], pp["p_bn"],
                       pp["p_w2"], pp["p_b2"], n_valid=n, g_valid=num_graphs)
    return out[:num_graphs, :output_dim]


# ----------------------------------------------------------------------------
# Parameter padding: hidden zero-padded 64 -> H_pad (lane-dense), MXU weights
# cast to bf16, conv2's first Linear split into node-level (W1a/W1b) + edge
# (W1c, b1) pieces, BN/bias vectors packed into [8, H_pad] blocks.
# ----------------------------------------------------------------------------
def pad_params(p, *, node_features, pos_dim, hidden, h_pad, out_pad):
    c, h = node_features, hidden
    k1_pad = _round_up(2 * c + pos_dim, 8)

    def bf(a):
        return a.astype(jnp.bfloat16)

    def pack_rows(rows, width):
        out = jnp.zeros((8, width), jnp.float32)
        for i, r in enumerate(rows):
            out = out.at[i, : r.shape[-1]].set(r.reshape(-1))
        return out

    return {
        # conv1: single packed first Linear over [x_i | x_j | dpos]
        "c1_w1": bf(_pad2d(p["c1_w1"], k1_pad, h_pad)),
        "c1_bias": pack_rows([p["c1_b1"], p["c1_b2"]], h_pad),     # row0=b1, row1=b2
        "c1_w2": bf(_pad2d(p["c1_w2"], h_pad, h_pad)),
        "bn1": pack_rows([p["bn1_g"], p["bn1_b"]], h_pad),         # row0=gamma, row1=beta
        # conv2: first Linear hoisted (x_i part / x_j part applied per node)
        "c2_w1a": bf(_pad2d(p["c2_w1"][:h], h_pad, h_pad)),
        "c2_w1b": bf(_pad2d(p["c2_w1"][h:2 * h], h_pad, h_pad)),
        "c2_w1c": _pad2d(p["c2_w1"][2 * h:], pos_dim, h_pad),      # f32, used in wrapper
        "c2_b1": _pad2d(p["c2_b1"], 1, h_pad),                     # f32, used in wrapper
        "c2_bias": pack_rows([p["c2_b2"]], h_pad),                 # row0=b2
        "c2_w2": bf(_pad2d(p["c2_w2"], h_pad, h_pad)),
        "bn2": pack_rows([p["bn2_g"], p["bn2_b"]], h_pad),
        # predictor
        "p_w1": bf(_pad2d(p["p_w1"], h_pad, h_pad)),
        "p_bn": pack_rows([p["p_g"], p["p_b"]], h_pad),
        "p_w2": bf(_pad2d(p["p_w2"], h_pad, out_pad)),
        "p_b2": _pad2d(p["p_b2"], 1, out_pad),
    }


# ----------------------------------------------------------------------------
# Pure-JAX reference (unpadded f32 params, source of truth for semantics)
# ----------------------------------------------------------------------------
def reference_forward(params, x, pos, edge_index, batch, num_graphs):
    src, dst = edge_index[0], edge_index[1]
    n = x.shape[0]

    def conv(h, w1, b1, w2, b2):
        ef = jnp.concatenate([h[dst], h[src], pos[src] - pos[dst]], axis=-1)
        msg = jnp.maximum(ef @ w1 + b1, 0.0) @ w2 + b2
        return jax.ops.segment_sum(msg, dst, num_segments=n)

    def bn_relu_ref(h, g, b):
        mean = h.mean(0, keepdims=True)
        var = jnp.square(h - mean).mean(0, keepdims=True)
        return jnp.maximum((h - mean) * jax.lax.rsqrt(var + EPS) * g + b, 0.0)

    h = bn_relu_ref(conv(x, params["c1_w1"], params["c1_b1"],
                         params["c1_w2"], params["c1_b2"]),
                    params["bn1_g"], params["bn1_b"])
    h = bn_relu_ref(conv(h, params["c2_w1"], params["c2_b1"],
                         params["c2_w2"], params["c2_b2"]),
                    params["bn2_g"], params["bn2_b"])
    pooled = jax.ops.segment_sum(h, batch, num_segments=num_graphs)
    hp = bn_relu_ref(pooled @ params["p_w1"], params["p_g"], params["p_b"])
    return hp @ params["p_w2"] + params["p_b2"]


# ----------------------------------------------------------------------------
# Deterministic parameter init (shapes follow the module __init__, unpadded)
# ----------------------------------------------------------------------------
def init_params(key, node_features=1, pos_dim=3, hidden=64, output=1):
    ks = jax.random.split(key, 10)
    f1 = node_features * 2 + pos_dim
    f2 = hidden * 2 + pos_dim

    def lin(k, fan_in, fan_out):
        bound = 1.0 / jnp.sqrt(jnp.float32(fan_in))
        return jax.random.uniform(k, (fan_in, fan_out), jnp.float32, -bound, bound)

    return {
        "c1_w1": lin(ks[0], f1, hidden), "c1_b1": 0.01 * jnp.ones((1, hidden), jnp.float32),
        "c1_w2": lin(ks[1], hidden, hidden), "c1_b2": 0.01 * jnp.ones((1, hidden), jnp.float32),
        "bn1_g": jnp.ones((1, hidden), jnp.float32), "bn1_b": jnp.zeros((1, hidden), jnp.float32),
        "c2_w1": lin(ks[2], f2, hidden), "c2_b1": 0.01 * jnp.ones((1, hidden), jnp.float32),
        "c2_w2": lin(ks[3], hidden, hidden), "c2_b2": 0.01 * jnp.ones((1, hidden), jnp.float32),
        "bn2_g": jnp.ones((1, hidden), jnp.float32), "bn2_b": jnp.zeros((1, hidden), jnp.float32),
        "p_w1": lin(ks[4], hidden, hidden),
        "p_g": jnp.ones((1, hidden), jnp.float32), "p_b": jnp.zeros((1, hidden), jnp.float32),
        "p_w2": lin(ks[5], hidden, output), "p_b2": 0.01 * jnp.ones((1, output), jnp.float32),
    }


if __name__ == "__main__":
    key = jax.random.PRNGKey(0)
    N, E, G = 64, 384, 4                   # nodes, edges, graphs (E not a tile multiple)
    NODE_FEAT, POS_DIM, HIDDEN, OUT = 1, 3, 64, 1
    H_PAD, OUT_PAD = 128, 128              # lane-dense compute widths

    k_x, k_pos, k_src, k_dst, k_p = jax.random.split(key, 5)
    x = jax.random.normal(k_x, (N, NODE_FEAT), jnp.float32)
    pos = jax.random.normal(k_pos, (N, POS_DIM), jnp.float32)
    src = jax.random.randint(k_src, (E,), 0, N, jnp.int32)
    dst = jax.random.randint(k_dst, (E,), 0, N, jnp.int32)
    edge_index = jnp.stack([src, dst], axis=0)                   # [2, E]
    batch = jnp.repeat(jnp.arange(G, dtype=jnp.int32), N // G)   # [N]

    params = init_params(k_p, NODE_FEAT, POS_DIM, HIDDEN, OUT)
    pp = pad_params(params, node_features=NODE_FEAT, pos_dim=POS_DIM,
                    hidden=HIDDEN, h_pad=H_PAD, out_pad=OUT_PAD)

    out = custom_gnn_forward(pp, x, pos, edge_index, batch, G, OUT,
                             tile_e=256, num_core_splits=2)
    out = jax.block_until_ready(out)

    ref = jax.block_until_ready(reference_forward(params, x, pos, edge_index, batch, G))
    assert out.shape == (G, OUT)
    # end-to-end bf16 MXU operands (f32 accumulation) vs the f32 reference over
    # 2 conv layers + 3 BNs accumulate a few percent; check vs output scale.
    tol = 8e-2 * (1.0 + float(jnp.max(jnp.abs(ref))))
    err = float(jnp.max(jnp.abs(out - ref)))
    assert err < tol, (err, tol)

    print("KERNEL_OK")
</pallas_src>

<mosaic_0001>
module attributes {stable_mosaic.version = 11 : i64} {
  func.func @_conv1_scatter_kernel(%arg0: i32, %arg1: i32, %arg2: memref<256x8xbf16, #tpu.memory_space<vmem>>, %arg3: memref<8x128xbf16, #tpu.memory_space<vmem>>, %arg4: memref<8x128xf32, #tpu.memory_space<vmem>>, %arg5: memref<128x128xbf16, #tpu.memory_space<vmem>>, %arg6: memref<64x256xbf16, #tpu.memory_space<vmem>>, %arg7: memref<1x64x128xbf16, #tpu.memory_space<vmem>>, %arg8: memref<64x128xf32, #tpu.memory_space<vmem>>) attributes {dimension_semantics = [#tpu.dimension_semantics<parallel>, #tpu.dimension_semantics<arbitrary>], iteration_bounds = array<i64: 2, 1>, scalar_prefetch = 0 : i64, scratch_operands = 1 : i64, tpu.core_type = #tpu.core_type<tc>, window_params = [{transform_indices = @transform_0, window_bounds = array<i64: 256, 8>}, {pipeline_mode = #tpu.pipeline_mode<synchronous>, transform_indices = @transform_1, window_bounds = array<i64: 8, 128>}, {pipeline_mode = #tpu.pipeline_mode<synchronous>, transform_indices = @transform_2, window_bounds = array<i64: 8, 128>}, {pipeline_mode = #tpu.pipeline_mode<synchronous>, transform_indices = @transform_3, window_bounds = array<i64: 128, 128>}, {transform_indices = @transform_4, window_bounds = array<i64: 64, 256>}, {transform_indices = @transform_5, window_bounds = array<i64: 1, 64, 128>}]} {
    %c0_i32 = arith.constant 0 : i32
    %0 = arith.cmpi eq, %arg1, %c0_i32 : i32
    %1 = arith.extui %0 : i1 to i32
    %c0_i32_0 = arith.constant 0 : i32
    %2 = arith.cmpi ne, %1, %c0_i32_0 : i32
    scf.if %2 {
      %cst_20 = arith.constant 0.000000e+00 : f32
      %26 = vector.broadcast %cst_20 : f32 to vector<64x128xf32>
      %c0_21 = arith.constant 0 : index
      %c0_22 = arith.constant 0 : index
      %27 = vector.load %arg8[%c0_21, %c0_22] : memref<64x128xf32, #tpu.memory_space<vmem>>, vector<64x128xf32>
      tpu.vector_store %arg8[%c0_21, %c0_22], %26 {strides = array<i32>} : memref<64x128xf32, #tpu.memory_space<vmem>>, vector<64x128xf32>,
    } else {
    }
    %c0 = arith.constant 0 : index
    %c0_1 = arith.constant 0 : index
    %3 = vector.load %arg2[%c0, %c0_1] : memref<256x8xbf16, #tpu.memory_space<vmem>>, vector<256x8xbf16>
    %c0_2 = arith.constant 0 : index
    %c0_3 = arith.constant 0 : index
    %4 = vector.load %arg3[%c0_2, %c0_3] : memref<8x128xbf16, #tpu.memory_space<vmem>>, vector<8x128xbf16>
    %cst = arith.constant dense<0.000000e+00> : vector<256x128xf32>
    %5 = tpu.matmul %3, %4, %cst {dimension_numbers = #tpu.dot_dimension_numbers<[1], [0], [0], [1], [0, 0, 1, 1], [], []>} : vector<256x8xbf16>, vector<8x128xbf16>, vector<256x128xf32> -> vector<256x128xf32>
    %c0_4 = arith.constant 0 : index
    %c0_5 = arith.constant 0 : index
    %6 = vector.load %arg4[%c0_4, %c0_5] : memref<8x128xf32, #tpu.memory_space<vmem>>, vector<1x128xf32>
    %7 = vector.broadcast %6 : vector<1x128xf32> to vector<256x128xf32>
    %8 = arith.addf %5, %7 : vector<256x128xf32>
    %cst_6 = arith.constant 0.000000e+00 : f32
    %9 = vector.broadcast %cst_6 : f32 to vector<256x128xf32>
    %10 = arith.maximumf %8, %9 : vector<256x128xf32>
    %11 = arith.truncf %10 : vector<256x128xf32> to vector<256x128xbf16>
    %c0_7 = arith.constant 0 : index
    %c0_8 = arith.constant 0 : index
    %12 = vector.load %arg5[%c0_7, %c0_8] : memref<128x128xbf16, #tpu.memory_space<vmem>>, vector<128x128xbf16>
    %cst_9 = arith.constant dense<0.000000e+00> : vector<256x128xf32>
    %13 = tpu.matmul %11, %12, %cst_9 {dimension_numbers = #tpu.dot_dimension_numbers<[1], [0], [0], [1], [0, 0, 1, 1], [], []>} : vector<256x128xbf16>, vector<128x128xbf16>, vector<256x128xf32> -> vector<256x128xf32>
    %c1 = arith.constant 1 : index
    %c0_10 = arith.constant 0 : index
    %14 = vector.load %arg4[%c1, %c0_10] : memref<8x128xf32, #tpu.memory_space<vmem>>, vector<1x128xf32>
    %15 = vector.broadcast %14 : vector<1x128xf32> to vector<256x128xf32>
    %16 = arith.addf %13, %15 : vector<256x128xf32>
    %c0_11 = arith.constant 0 : index
    %c0_12 = arith.constant 0 : index
    %17 = vector.load %arg8[%c0_11, %c0_12] : memref<64x128xf32, #tpu.memory_space<vmem>>, vector<64x128xf32>
    %c0_13 = arith.constant 0 : index
    %c0_14 = arith.constant 0 : index
    %18 = vector.load %arg6[%c0_13, %c0_14] : memref<64x256xbf16, #tpu.memory_space<vmem>>, vector<64x256xbf16>
    %19 = arith.truncf %16 : vector<256x128xf32> to vector<256x128xbf16>
    %cst_15 = arith.constant dense<0.000000e+00> : vector<64x128xf32>
    %20 = tpu.matmul %18, %19, %cst_15 {dimension_numbers = #tpu.dot_dimension_numbers<[1], [0], [0], [1], [0, 0, 1, 1], [], []>} : vector<64x256xbf16>, vector<256x128xbf16>, vector<64x128xf32> -> vector<64x128xf32>
    %21 = arith.addf %17, %20 : vector<64x128xf32>
    %c0_16 = arith.constant 0 : index
    %c0_17 = arith.constant 0 : index
    %22 = vector.load %arg8[%c0_16, %c0_17] : memref<64x128xf32, #tpu.memory_space<vmem>>, vector<64x128xf32>
    tpu.vector_store %arg8[%c0_16, %c0_17], %21 {strides = array<i32>} : memref<64x128xf32, #tpu.memory_space<vmem>>, vector<64x128xf32>,
    %c0_i32_18 = arith.constant 0 : i32
    %23 = arith.cmpi eq, %arg1, %c0_i32_18 : i32
    %24 = arith.extui %23 : i1 to i32
    %c0_i32_19 = arith.constant 0 : i32
    %25 = arith.cmpi ne, %24, %c0_i32_19 : i32
    scf.if %25 {
      %c0_20 = arith.constant 0 : index
      %c0_21 = arith.constant 0 : index
      %26 = vector.load %arg8[%c0_20, %c0_21] : memref<64x128xf32, #tpu.memory_space<vmem>>, vector<64x128xf32>
      %27 = arith.truncf %26 : vector<64x128xf32> to vector<64x128xbf16>
      %c0_22 = arith.constant 0 : index
      %c0_23 = arith.constant 0 : index
      %c0_24 = arith.constant 0 : index
      %28 = vector.load %arg7[%c0_22, %c0_23, %c0_24] : memref<1x64x128xbf16, #tpu.memory_space<vmem>>, vector<1x64x128xbf16>
      %29 = vector.shape_cast %28 : vector<1x64x128xbf16> to vector<64x128xbf16>
      %30 = vector.shape_cast %27 : vector<64x128xbf16> to vector<1x64x128xbf16>
      tpu.vector_store %arg7[%c0_22, %c0_23, %c0_24], %30 {strides = array<i32>} : memref<1x64x128xbf16, #tpu.memory_space<vmem>>, vector<1x64x128xbf16>,
    } else {
    }
    return
  }
  func.func @transform_0(%arg0: i32, %arg1: i32) -> (i32, i32) {
    %c1_i32 = arith.constant 1 : i32
    %0 = arith.muli %arg0, %c1_i32 : i32
    %1 = arith.addi %0, %arg1 : i32
    %c0_i32 = arith.constant 0 : i32
    %c0_i32_0 = arith.constant 0 : i32
    return %1, %c0_i32 : i32, i32
  }
  func.func @transform_1(%arg0: i32, %arg1: i32) -> (i32, i32) {
    %c0_i32 = arith.constant 0 : i32
    %c0_i32_0 = arith.constant 0 : i32
    %c0_i32_1 = arith.constant 0 : i32
    return %c0_i32, %c0_i32_0 : i32, i32
  }
  func.func @transform_2(%arg0: i32, %arg1: i32) -> (i32, i32) {
    %c0_i32 = arith.constant 0 : i32
    %c0_i32_0 = arith.constant 0 : i32
    %c0_i32_1 = arith.constant 0 : i32
    return %c0_i32, %c0_i32_0 : i32, i32
  }
  func.func @transform_3(%arg0: i32, %arg1: i32) -> (i32, i32) {
    %c0_i32 = arith.constant 0 : i32
    %c0_i32_0 = arith.constant 0 : i32
    %c0_i32_1 = arith.constant 0 : i32
    return %c0_i32, %c0_i32_0 : i32, i32
  }
  func.func @transform_4(%arg0: i32, %arg1: i32) -> (i32, i32) {
    %c1_i32 = arith.constant 1 : i32
    %0 = arith.muli %arg0, %c1_i32 : i32
    %1 = arith.addi %0, %arg1 : i32
    %c0_i32 = arith.constant 0 : i32
    %c0_i32_0 = arith.constant 0 : i32
    return %c0_i32, %1 : i32, i32
  }
  func.func @transform_5(%arg0: i32, %arg1: i32) -> (i32, i32, i32) {
    %c0_i32 = arith.constant 0 : i32
    %c0_i32_0 = arith.constant 0 : i32
    %c0_i32_1 = arith.constant 0 : i32
    return %arg0, %c0_i32, %c0_i32_0 : i32, i32, i32
  }
}

</mosaic_0001>

<llo_original>
// kernel: tpu_custom_call.1
$region0: #{tpu_custom_call.1}
  #allocation0 [shape = 'u32[]', space=smem, size = 0x4, offset = 0x4, fixed_abs, tag = 'smem constant byte address 0x4 - core index']
  #allocation1 [shape = 'u32[144,128]{1,0:T(1,128)}', space=vmem, size = 0x12000, scoped, tag = 'internal scratch']
  #allocation2 [shape = 'f32[64,128]{1,0:T(8,128)}', space=vmem, size = 0x8000, scoped, tag = 'scratch operand']
  %s0 = inlined_call_operand.vmem [shape: bf16[512,8], index: 0, kind: input, shape index: {}]
  %s1 = inlined_call_operand.vmem [shape: bf16[8,128], index: 1, kind: input, shape index: {}]
  %s2 = inlined_call_operand.vmem [shape: f32[8,128], index: 2, kind: input, shape index: {}]
  %s3 = inlined_call_operand.vmem [shape: bf16[128,128], index: 3, kind: input, shape index: {}]
  %s4 = inlined_call_operand.vmem [shape: bf16[64,512], index: 4, kind: input, shape index: {}]
  %s5 = inlined_call_operand.hbm [shape: bf16[2,64,128], index: 5, kind: output, shape index: {}]
  %s6 = sld [smem:[#allocation0]]
  $region99: #{tpu_custom_call.1} parent=0
    _
  %s8 = ssub.s32 1, %s6
  %s9 = scalar_select 0, %s8, %s6
  $region1: #{tpu_custom_call.1} parent=0
    #allocation3 [shape = 'u8[65536]{0}', space=vmem, size = 0x10000, scoped, tag = 'input window, operand 4']
    #allocation4 [shape = 'u8[32768]{0}', space=vmem, size = 0x8000, scoped, tag = 'output window, operand 0']
    #allocation5 [shape = 's32[2]{0}', space=sflag, size = 0x8, scoped, tag = 'scoped memory for tpu_custom_call.1']
    %10 = vsyncpa [#allocation5], 0
    %s11 = scalar_lea.sflag [#allocation5], 1
    %12 = vsyncpa %s11, 0
    loop: start=0, step=1, limit=4
    $region2: #{tpu_custom_call.1} parent=1 // loop_pre_header
      _
    $region3: #{tpu_custom_call.1} parent=1 // loop_header
      %s14 = sphi 0, %s18
      %p15 = scmp.ge.s32.totalorder %s14, 4
      %s21 = sphi 0, %s33
      %s22 = sphi 0, %s29
      %s23 = sphi 0, %s21
      %s24 = sphi 0, %s22
      %s25 = sphi 0, %s23
      %s26 = sphi 0, %s24
      %s38 = sphi 0, %s40
      %s41 = sphi 0, %s38
      %s42 = sphi 0, %s41
      %s58 = sphi 0, %s42
      %s62 = sphi 0, %s62
      %s64 = sphi 0, %s62
      %s65 = sphi 0, %s64
      %s79 = sphi 0, %s65
      %s83 = sphi 0, %s83
      %s85 = sphi 0, %s83
      %s86 = sphi 0, %s85
      %s100 = sphi 0, %s86
      %s104 = sphi 0, %s104
      %s106 = sphi 0, %s104
      %s107 = sphi 0, %s106
      %s121 = sphi 0, %s107
      %s129 = sphi 0, %s131
      %s132 = sphi 0, %s129
      %s133 = sphi 0, %s132
      %s149 = sphi 0, %s133
      %s155 = sphi 0, %s157
      %s158 = sphi 0, %s155
      %s159 = sphi 0, %s158
      %s175 = sphi 0, %s159
    $region4: #{tpu_custom_call.1} parent=1 // loop_header_branch
      %17 = sbr.rel (%p15) target = $region8
    $region5: #{tpu_custom_call.1} parent=1 // loop_body
      %s19 = ssub.s32 %s14, 1
      %s20 = ssub.s32 %s14, 2
      %s27 = sadd.s32 1, %s22
      %p28 = scmp.ge.s32.totalorder %s27, 1
      %s29 = scalar_select %p28, 0, %s27
      %s30 = sadd.s32 1, %s21
      %s31 = scalar_select %p28, %s30, %s21
      %p32 = scmp.ge.s32.totalorder %s31, 2
      %s33 = scalar_select %p32, 0, %s31
      %s34 = sadd.s32 %s21, %s22
      %s35 = sadd.s32 %s33, %s29
      %s36 = ssub.s32 %s34, %s35
      %p37 = scmp.eq.s32.totalorder %s36, 0
      %s39 = sadd.s32 %s38, 1
      %s40 = scalar_select %p37, %s38, %s39
      %p43 = pneg %p37
      %p44 = scmp.eq.s32.totalorder %s14, 1
      %p45 = por %p43, %p44
      %p46 = scmp.ne.s32.totalorder %s38, %s41
      %p47 = scmp.eq.s32.totalorder %s14, 0
      %p48 = por %p46, %p47
      %p49 = scmp.ne.s32.totalorder %s38, %s41
      %p50 = scmp.eq.s32.totalorder %s19, 1
      %p51 = por %p49, %p50
      %p52 = scmp.ne.s32.totalorder %s41, %s42
      %p53 = scmp.eq.s32.totalorder %s19, 0
      %p54 = por %p52, %p53
      %p55 = scmp.ne.s32.totalorder %s41, %s42
      %p56 = scmp.eq.s32.totalorder %s20, 1
      %p57 = por %p55, %p56
      %p59 = scmp.ne.s32.totalorder %s42, %s58
      %p60 = scmp.eq.s32.totalorder %s20, 0
      %p61 = por %p59, %p60
      %s63 = sadd.s32 %s62, 1
      %p66 = scmp.eq.s32.totalorder %s14, 1
      %p67 = scmp.ne.s32.totalorder %s62, %s64
      %p68 = scmp.eq.s32.totalorder %s14, 0
      %p69 = por %p67, %p68
      %p70 = scmp.ne.s32.totalorder %s62, %s64
      %p71 = scmp.eq.s32.totalorder %s19, 1
      %p72 = por %p70, %p71
      %p73 = scmp.ne.s32.totalorder %s64, %s65
      %p74 = scmp.eq.s32.totalorder %s19, 0
      %p75 = por %p73, %p74
      %p76 = scmp.ne.s32.totalorder %s64, %s65
      %p77 = scmp.eq.s32.totalorder %s20, 1
      %p78 = por %p76, %p77
      %p80 = scmp.ne.s32.totalorder %s65, %s79
      %p81 = scmp.eq.s32.totalorder %s20, 0
      %p82 = por %p80, %p81
      %s84 = sadd.s32 %s83, 1
      %p87 = scmp.eq.s32.totalorder %s14, 1
      %p88 = scmp.ne.s32.totalorder %s83, %s85
      %p89 = scmp.eq.s32.totalorder %s14, 0
      %p90 = por %p88, %p89
      %p91 = scmp.ne.s32.totalorder %s83, %s85
      %p92 = scmp.eq.s32.totalorder %s19, 1
      %p93 = por %p91, %p92
      %p94 = scmp.ne.s32.totalorder %s85, %s86
      %p95 = scmp.eq.s32.totalorder %s19, 0
      %p96 = por %p94, %p95
      %p97 = scmp.ne.s32.totalorder %s85, %s86
      %p98 = scmp.eq.s32.totalorder %s20, 1
      %p99 = por %p97, %p98
      %p101 = scmp.ne.s32.totalorder %s86, %s100
      %p102 = scmp.eq.s32.totalorder %s20, 0
      %p103 = por %p101, %p102
      %s105 = sadd.s32 %s104, 1
      %p108 = scmp.eq.s32.totalorder %s14, 1
      %p109 = scmp.ne.s32.totalorder %s104, %s106
      %p110 = scmp.eq.s32.totalorder %s14, 0
      %p111 = por %p109, %p110
      %p112 = scmp.ne.s32.totalorder %s104, %s106
      %p113 = scmp.eq.s32.totalorder %s19, 1
      %p114 = por %p112, %p113
      %p115 = scmp.ne.s32.totalorder %s106, %s107
      %p116 = scmp.eq.s32.totalorder %s19, 0
      %p117 = por %p115, %p116
      %p118 = scmp.ne.s32.totalorder %s106, %s107
      %p119 = scmp.eq.s32.totalorder %s20, 1
      %p120 = por %p118, %p119
      %p122 = scmp.ne.s32.totalorder %s107, %s121
      %p123 = scmp.eq.s32.totalorder %s20, 0
      %p124 = por %p122, %p123
      %s125 = sadd.s32 %s21, %s22
      %s126 = sadd.s32 %s33, %s29
      %s127 = ssub.s32 %s125, %s126
      %p128 = scmp.eq.s32.totalorder %s127, 0
      %s130 = sadd.s32 %s129, 1
      %s131 = scalar_select %p128, %s129, %s130
      %p134 = pneg %p128
      %p135 = scmp.eq.s32.totalorder %s14, 1
      %p136 = por %p134, %p135
      %p137 = scmp.ne.s32.totalorder %s129, %s132
      %p138 = scmp.eq.s32.totalorder %s14, 0
      %p139 = por %p137, %p138
      %p140 = scmp.ne.s32.totalorder %s129, %s132
      %p141 = scmp.eq.s32.totalorder %s19, 1
      %p142 = por %p140, %p141
      %p143 = scmp.ne.s32.totalorder %s132, %s133
      %p144 = scmp.eq.s32.totalorder %s19, 0
      %p145 = por %p143, %p144
      %p146 = scmp.ne.s32.totalorder %s132, %s133
      %p147 = scmp.eq.s32.totalorder %s20, 1
      %p148 = por %p146, %p147
      %p150 = scmp.ne.s32.totalorder %s133, %s149
      %p151 = scmp.eq.s32.totalorder %s20, 0
      %p152 = por %p150, %p151
      %s153 = ssub.s32 %s21, %s33
      %p154 = scmp.eq.s32.totalorder %s153, 0
      %s156 = sadd.s32 %s155, 1
      %s157 = scalar_select %p154, %s155, %s156
      %p160 = pneg %p154
      %p161 = scmp.eq.s32.totalorder %s14, 1
      %p162 = por %p160, %p161
      %p163 = scmp.ne.s32.totalorder %s155, %s158
      %p164 = scmp.eq.s32.totalorder %s14, 0
      %p165 = por %p163, %p164
      %p166 = scmp.ne.s32.totalorder %s155, %s158
      %p167 = scmp.eq.s32.totalorder %s19, 1
      %p168 = por %p166, %p167
      %p169 = scmp.ne.s32.totalorder %s158, %s159
      %p170 = scmp.eq.s32.totalorder %s19, 0
      %p171 = por %p169, %p170
      %p172 = scmp.ne.s32.totalorder %s158, %s159
      %p173 = scmp.eq.s32.totalorder %s20, 1
      %p174 = por %p172, %p173
      %p176 = scmp.ne.s32.totalorder %s159, %s175
      %p177 = scmp.eq.s32.totalorder %s20, 0
      %p178 = por %p176, %p177
      %p179 = scmp.le.s32.totalorder 1, %s14
      %p180 = scmp.lt.s32.totalorder %s14, 3
      %p181 = pnand %p179, %p180
      %p182 = pneg %p181
      // Predicated region
      $region9: #{tpu_custom_call.1} parent=5 // pred_check
        _
      $region10: #{tpu_custom_call.1} parent=5 // pred_check_branch
        %184 = sbr.rel (%p181) target = $region12
      $region11: #{tpu_custom_call.1} parent=5 // pred_region
        %s185 = ssub.s32 %s14, 1
        // Predicated region
        $region13: #{tpu_custom_call.1} parent=11 // pred_check
          %p186 = pneg %p75
        $region14: #{tpu_custom_call.1} parent=11 // pred_check_branch
          %188 = sbr.rel (%p186) target = $region16
        $region15: #{tpu_custom_call.1} parent=11 // pred_region
          _
        $region16: #{tpu_custom_call.1} parent=11 // pred_fallthru
          _
        // Predicated region
        $region17: #{tpu_custom_call.1} parent=11 // pred_check
          %p189 = pneg %p96
        $region18: #{tpu_custom_call.1} parent=11 // pred_check_branch
          %191 = sbr.rel (%p189) target = $region20
        $region19: #{tpu_custom_call.1} parent=11 // pred_region
          _
        $region20: #{tpu_custom_call.1} parent=11 // pred_fallthru
          _
        // Predicated region
        $region21: #{tpu_custom_call.1} parent=11 // pred_check
          %p192 = pneg %p117
        $region22: #{tpu_custom_call.1} parent=11 // pred_check_branch
          %194 = sbr.rel (%p192) target = $region24
        $region23: #{tpu_custom_call.1} parent=11 // pred_region
          _
        $region24: #{tpu_custom_call.1} parent=11 // pred_fallthru
          _
      $region12: #{tpu_custom_call.1} parent=5 // pred_fallthru
        _
      %p195 = scmp.lt.s32.totalorder %s14, 2
      // Predicated region
      $region25: #{tpu_custom_call.1} parent=5 // pred_check
        %p196 = pneg %p195
      $region26: #{tpu_custom_call.1} parent=5 // pred_check_branch
        %198 = sbr.rel (%p196) target = $region28
      $region27: #{tpu_custom_call.1} parent=5 // pred_region
        // Predicated region
        $region29: #{tpu_custom_call.1} parent=27 // pred_check
          %p199 = pneg %p48
        $region30: #{tpu_custom_call.1} parent=27 // pred_check_branch
          %201 = sbr.rel (%p199) target = $region32
        $region31: #{tpu_custom_call.1} parent=27 // pred_region
          %s202 = sadd.s32 %s21, %s22
          %s203 = smul.u32 32, %s202
          %p204 = scmp.lt.s32.totalorder %s203, 63
          %s205 = scalar_select %p204, %s203, 63
          %s206 = smul.addr %s205, 4
          %s207 = scalar_lea.vmem %s0, %s206
          %s208 = sadd.s32 %s21, %s22
          %s209 = smul.u32 32, %s208
        $region32: #{tpu_custom_call.1} parent=27 // pred_fallthru
          _
        // Predicated region
        $region33: #{tpu_custom_call.1} parent=27 // pred_check
          %p210 = pneg %p139
        $region34: #{tpu_custom_call.1} parent=27 // pred_check_branch
          %212 = sbr.rel (%p210) target = $region36
        $region35: #{tpu_custom_call.1} parent=27 // pred_region
          %s213 = sand.u32 %s129, 1
          %s214 = sand.u32 %s129, 1
          %s215 = smul.addr %s214, 64
          %s216 = scalar_lea.vmem [#allocation3], %s215
          %s217 = sadd.s32 %s21, %s22
          %s218 = smul.u32 2, %s217
          %s219 = smul.addr %s218, 4
          %s220 = scalar_lea.vmem %s4, %s219
          // Predicated region
          $region37: #{tpu_custom_call.1} parent=35 // pred_check
            _
          $region38: #{tpu_custom_call.1} parent=35 // pred_check_branch
            %222 = sbr.rel (0) target = $region40
          $region39: #{tpu_custom_call.1} parent=35 // pred_region
            // Predicated region
            $region41: #{tpu_custom_call.1} parent=39 // pred_check
              _
            $region42: #{tpu_custom_call.1} parent=39 // pred_check_branch
              %224 = sbr.rel (0) target = $region44
            $region43: #{tpu_custom_call.1} parent=39 // pred_region
              // Predicated region
              $region56: #{tpu_custom_call.1} parent=43 // pred_check
                _
              $region57: #{tpu_custom_call.1} parent=43 // pred_check_branch
                %253 = sbr.rel (0) target = $region59
              $region58: #{tpu_custom_call.1} parent=43 // pred_region
                loop: start=0, step=1, limit=1
                $region60: #{tpu_custom_call.1} parent=58 // loop_pre_header
                  _
                $region61: #{tpu_custom_call.1} parent=58 // loop_header
                  %s255 = sphi 0, %s259
                  %p256 = scmp.ge.s32.totalorder %s255, 1
                  %s260 = sphi %s220, %s220
                  %s261 = sphi %s216, %s216
                $region62: #{tpu_custom_call.1} parent=58 // loop_header_branch
                  %258 = sbr.rel (%p256) target = $region66
                $region63: #{tpu_custom_call.1} parent=58 // loop_body
                  %v262 = vld [vmem:[%s260] sm:$0xff]
                  %263 = vst [vmem:[%s261] sm:$0xff] %v262
                  %v264 = vld [vmem:[%s260 + $0x10] sm:$0xff]
                  %265 = vst [vmem:[%s261 + $0x8] sm:$0xff] %v264
                  %v266 = vld [vmem:[%s260 + $0x20] sm:$0xff]
                  %267 = vst [vmem:[%s261 + $0x10] sm:$0xff] %v266
                  %v268 = vld [vmem:[%s260 + $0x30] sm:$0xff]
                  %269 = vst [vmem:[%s261 + $0x18] sm:$0xff] %v268
                  %v270 = vld [vmem:[%s260 + $0x40] sm:$0xff]
                  %271 = vst [vmem:[%s261 + $0x20] sm:$0xff] %v270
                  %v272 = vld [vmem:[%s260 + $0x50] sm:$0xff]
                  %273 = vst [vmem:[%s261 + $0x28] sm:$0xff] %v272
                  %v274 = vld [vmem:[%s260 + $0x60] sm:$0xff]
                  %275 = vst [vmem:[%s261 + $0x30] sm:$0xff] %v274
                  %v276 = vld [vmem:[%s260 + $0x70] sm:$0xff]
                  %277 = vst [vmem:[%s261 + $0x38] sm:$0xff] %v276
                $region64: #{tpu_custom_call.1} parent=58 // loop_footer
                  %s259 = sadd.s32 1, %s255
                $region65: #{tpu_custom_call.1} parent=58 // loop_footer_branch
                  %254 = sbr.rel target = $region61
                $region66: #{tpu_custom_call.1} parent=58 // loop_exit
                  _
              $region59: #{tpu_custom_call.1} parent=43 // pred_fallthru
                _
              // Predicated region
              $region67: #{tpu_custom_call.1} parent=43 // pred_check
                _
              $region68: #{tpu_custom_call.1} parent=43 // pred_check_branch
                %279 = sbr.rel target = $region70
              $region69: #{tpu_custom_call.1} parent=43 // pred_region
                _
              $region70: #{tpu_custom_call.1} parent=43 // pred_fallthru
                _
            $region44: #{tpu_custom_call.1} parent=39 // pred_fallthru
              _
            // Predicated region
            $region45: #{tpu_custom_call.1} parent=39 // pred_check
              _
            $region46: #{tpu_custom_call.1} parent=39 // pred_check_branch
              %226 = sbr.rel target = $region48
            $region47: #{tpu_custom_call.1} parent=39 // pred_region
              loop: start=0, step=1, limit=1
              $region49: #{tpu_custom_call.1} parent=47 // loop_pre_header
                _
              $region50: #{tpu_custom_call.1} parent=47 // loop_header
                %s229 = sphi 0, %s233
                %p230 = scmp.ge.s32.totalorder %s229, 1
                %s234 = sphi %s220, %s220
                %s235 = sphi %s216, %s216
              $region51: #{tpu_custom_call.1} parent=47 // loop_header_branch
                %232 = sbr.rel (%p230) target = $region55
              $region52: #{tpu_custom_call.1} parent=47 // loop_body
                %v236 = vld [vmem:[%s234] sm:$0xff]
                %237 = vst [vmem:[%s235] sm:$0xff] %v236
                %v238 = vld [vmem:[%s234 + $0x10] sm:$0xff]
                %239 = vst [vmem:[%s235 + $0x8] sm:$0xff] %v238
                %v240 = vld [vmem:[%s234 + $0x20] sm:$0xff]
                %241 = vst [vmem:[%s235 + $0x10] sm:$0xff] %v240
                %v242 = vld [vmem:[%s234 + $0x30] sm:$0xff]
                %243 = vst [vmem:[%s235 + $0x18] sm:$0xff] %v242
                %v244 = vld [vmem:[%s234 + $0x40] sm:$0xff]
                %245 = vst [vmem:[%s235 + $0x20] sm:$0xff] %v244
                %v246 = vld [vmem:[%s234 + $0x50] sm:$0xff]
                %247 = vst [vmem:[%s235 + $0x28] sm:$0xff] %v246
                %v248 = vld [vmem:[%s234 + $0x60] sm:$0xff]
                %249 = vst [vmem:[%s235 + $0x30] sm:$0xff] %v248
                %v250 = vld [vmem:[%s234 + $0x70] sm:$0xff]
                %251 = vst [vmem:[%s235 + $0x38] sm:$0xff] %v250
              $region53: #{tpu_custom_call.1} parent=47 // loop_footer
                %s233 = sadd.s32 1, %s229
              $region54: #{tpu_custom_call.1} parent=47 // loop_footer_branch
                %228 = sbr.rel target = $region50
              $region55: #{tpu_custom_call.1} parent=47 // loop_exit
                _
            $region48: #{tpu_custom_call.1} parent=39 // pred_fallthru
              _
          $region40: #{tpu_custom_call.1} parent=35 // pred_fallthru
            _
          %280 = vnop
        $region36: #{tpu_custom_call.1} parent=27 // pred_fallthru
          _
      $region28: #{tpu_custom_call.1} parent=5 // pred_fallthru
        _
      %p281 = scmp.le.s32.totalorder 1, %s14
      %p282 = scmp.lt.s32.totalorder %s14, 3
      %p283 = pnand %p281, %p282
      %p284 = pneg %p283
      // Predicated region
      $region71: #{tpu_custom_call.1} parent=5 // pred_check
        _
      $region72: #{tpu_custom_call.1} parent=5 // pred_check_branch
        %286 = sbr.rel (%p283) target = $region74
      $region73: #{tpu_custom_call.1} parent=5 // pred_region
        %s287 = ssub.s32 %s14, 1
        %s288 = sand.u32 %s132, 1
        %s289 = sand.u32 %s132, 1
        %s290 = smul.addr %s289, 64
        %s291 = scalar_lea.vmem [#allocation3], %s290
        // Predicated region
        $region75: #{tpu_custom_call.1} parent=73 // pred_check
          %p292 = pneg %p145
        $region76: #{tpu_custom_call.1} parent=73 // pred_check_branch
          %294 = sbr.rel (%p292) target = $region78
        $region77: #{tpu_custom_call.1} parent=73 // pred_region
          _
        $region78: #{tpu_custom_call.1} parent=73 // pred_fallthru
          _
        %s295 = sadd.s32 %s23, %s24
        %s296 = smul.u32 32, %s295
        %p297 = scmp.lt.s32.totalorder %s296, 63
        %s298 = scalar_select %p297, %s296, 63
        %s299 = smul.addr %s298, 4
        %s300 = scalar_lea.vmem %s0, %s299
        %p301 = pneg %p54
        %p302 = pneg %p51
        %p303 = pneg %p75
        %p304 = pneg %p72
        %p305 = pneg %p96
        %p306 = pneg %p93
        %p307 = pneg %p117
        %p308 = pneg %p114
        %s309 = sand.u32 %s132, 1
        %s310 = sand.u32 %s132, 1
        %s311 = smul.addr %s310, 64
        %s312 = scalar_lea.vmem [#allocation3], %s311
        %p313 = pneg %p145
        %p314 = pneg %p142
        %p315 = pneg %p171
        %p316 = pneg %p168
        %s317 = sand.u32 %s158, 1
        %s318 = scalar_lea.sflag [#allocation5], %s317
        %s319 = sand.u32 %s158, 1
        %s320 = smul.addr %s319, 32
        %s321 = scalar_lea.vmem [#allocation4], %s320
        %s322 = sadd.s32 %s23, %s24
        %s323 = smul.u32 32, %s322
        %p324 = scmp.lt.s32.totalorder %s323, 63
        %s325 = scalar_select %p324, %s323, 63
        %s326 = smul.addr %s325, 4
        %s327 = scalar_lea.vmem %s0, %s326
        %s328 = sadd.s32 %s23, %s24
        %s329 = smul.u32 32, %s328
        %s330 = sadd.s32 %s23, %s24
        %s331 = smul.u32 2, %s330
        %p333 = scmp.eq.s32.totalorder %s24, 0
        // Predicated region
        $region79: #{tpu_custom_call.1} parent=73 // pred_check
          %p334 = pneg %p333
        $region80: #{tpu_custom_call.1} parent=73 // pred_check_branch
          %336 = sbr.rel (%p334) target = $region82
        $region81: #{tpu_custom_call.1} parent=73 // pred_region
          %337 = vst [vmem:[#allocation2] sm:$0xff] 0.0
          %338 = vst [vmem:[#allocation2 + $0x8] sm:$0xff] 0.0
          %339 = vst [vmem:[#allocation2 + $0x10] sm:$0xff] 0.0
          %340 = vst [vmem:[#allocation2 + $0x18] sm:$0xff] 0.0
          %341 = vst [vmem:[#allocation2 + $0x20] sm:$0xff] 0.0
          %342 = vst [vmem:[#allocation2 + $0x28] sm:$0xff] 0.0
          %343 = vst [vmem:[#allocation2 + $0x30] sm:$0xff] 0.0
          %344 = vst [vmem:[#allocation2 + $0x38] sm:$0xff] 0.0
        $region82: #{tpu_custom_call.1} parent=73 // pred_fallthru
          _
        %v345 = vld [vmem:[%s327] sm:$0xf]
        %v346 = vld [vmem:[%s327 + $0x4] sm:$0xf]
        %v347 = vld [vmem:[%s327 + $0x8] sm:$0xf]
        %v348 = vld [vmem:[%s327 + $0xc] sm:$0xf]
        %v349 = vld [vmem:[%s327 + $0x10] sm:$0xf]
        %v350 = vld [vmem:[%s327 + $0x14] sm:$0xf]
        %v351 = vld [vmem:[%s327 + $0x18] sm:$0xf]
        %v352 = vld [vmem:[%s327 + $0x1c] sm:$0xf]
        %v353 = vld [vmem:[%s327 + $0x20] sm:$0xf]
        %v354 = vld [vmem:[%s327 + $0x24] sm:$0xf]
        %v355 = vld [vmem:[%s327 + $0x28] sm:$0xf]
        %v356 = vld [vmem:[%s327 + $0x2c] sm:$0xf]
        %v357 = vld [vmem:[%s327 + $0x30] sm:$0xf]
        %v358 = vld [vmem:[%s327 + $0x34] sm:$0xf]
        %v359 = vld [vmem:[%s327 + $0x38] sm:$0xf]
        %v360 = vld [vmem:[%s327 + $0x3c] sm:$0xf]
        %v361 = vld [vmem:[%s327 + $0x40] sm:$0xf]
        %v362 = vld [vmem:[%s327 + $0x44] sm:$0xf]
        %v363 = vld [vmem:[%s327 + $0x48] sm:$0xf]
        %v364 = vld [vmem:[%s327 + $0x4c] sm:$0xf]
        %v365 = vld [vmem:[%s327 + $0x50] sm:$0xf]
        %v366 = vld [vmem:[%s327 + $0x54] sm:$0xf]
        %v367 = vld [vmem:[%s327 + $0x58] sm:$0xf]
        %v368 = vld [vmem:[%s327 + $0x5c] sm:$0xf]
        %v369 = vld [vmem:[%s327 + $0x60] sm:$0xf]
        %v370 = vld [vmem:[%s327 + $0x64] sm:$0xf]
        %v371 = vld [vmem:[%s327 + $0x68] sm:$0xf]
        %v372 = vld [vmem:[%s327 + $0x6c] sm:$0xf]
        %v373 = vld [vmem:[%s327 + $0x70] sm:$0xf]
        %v374 = vld [vmem:[%s327 + $0x74] sm:$0xf]
        %v375 = vld [vmem:[%s327 + $0x78] sm:$0xf]
        %v376 = vld [vmem:[%s327 + $0x7c] sm:$0xf]
        %v377 = vld [vmem:[%s1] sm:$0xf]
        %v378 = vld [vmem:[%s2] sm:$0x1]
        %v379 = vlaneseq
        %v380 = vshrl.u32 %v379, 7
        %v381 = vsub.s32 0, %v380
        %v382 = vrot.slane %v378, %v381
        %v415 = vunpack.c.l.b16 %v345
        %v416 = vunpack.c.l.b16 %v346
        %v417 = vunpack.c.l.b16 %v347
        %v418 = vunpack.c.l.b16 %v348
        %v419 = vunpack.c.l.b16 %v349
        %v420 = vunpack.c.l.b16 %v350
        %v421 = vunpack.c.l.b16 %v351
        %v422 = vunpack.c.l.b16 %v352
        %v423 = vunpack.c.l.b16 %v353
        %v424 = vunpack.c.l.b16 %v354
        %v425 = vunpack.c.l.b16 %v355
        %v426 = vunpack.c.l.b16 %v356
        %v427 = vunpack.c.l.b16 %v357
        %v428 = vunpack.c.l.b16 %v358
        %v429 = vunpack.c.l.b16 %v359
        %v430 = vunpack.c.l.b16 %v360
        %v431 = vunpack.c.l.b16 %v361
        %v432 = vunpack.c.l.b16 %v362
        %v433 = vunpack.c.l.b16 %v363
        %v434 = vunpack.c.l.b16 %v364
        %v435 = vunpack.c.l.b16 %v365
        %v436 = vunpack.c.l.b16 %v366
        %v437 = vunpack.c.l.b16 %v367
        %v438 = vunpack.c.l.b16 %v368
        %v439 = vunpack.c.l.b16 %v369
        %v440 = vunpack.c.l.b16 %v370
        %v441 = vunpack.c.l.b16 %v371
        %v442 = vunpack.c.l.b16 %v372
        %v443 = vunpack.c.l.b16 %v373
        %v444 = vunpack.c.l.b16 %v374
        %v445 = vunpack.c.l.b16 %v375
        %v446 = vunpack.c.l.b16 %v376
        %v447 = vpack.c.b16 %v416, %v415
        %v448 = vpack.c.b16 %v418, %v417
        %v449 = vpack.c.b16 %v420, %v419
        %v450 = vpack.c.b16 %v422, %v421
        %v451 = vpack.c.b16 %v424, %v423
        %v452 = vpack.c.b16 %v426, %v425
        %v453 = vpack.c.b16 %v428, %v427
        %v454 = vpack.c.b16 %v430, %v429
        %v455 = vpack.c.b16 %v432, %v431
        %v456 = vpack.c.b16 %v434, %v433
        %v457 = vpack.c.b16 %v436, %v435
        %v458 = vpack.c.b16 %v438, %v437
        %v459 = vpack.c.b16 %v440, %v439
        %v460 = vpack.c.b16 %v442, %v441
        %v461 = vpack.c.b16 %v444, %v443
        %v462 = vpack.c.b16 %v446, %v445
        %vm463 = vcmask 64512
        %v465 = vsel %vm463, %v447, 0
        %v468 = vsel %vm463, %v448, 0
        %v471 = vsel %vm463, %v449, 0
        %v474 = vsel %vm463, %v450, 0
        %v477 = vsel %vm463, %v451, 0
        %v480 = vsel %vm463, %v452, 0
        %v483 = vsel %vm463, %v453, 0
        %v486 = vsel %vm463, %v454, 0
        %v489 = vsel %vm463, %v455, 0
        %v492 = vsel %vm463, %v456, 0
        %v495 = vsel %vm463, %v457, 0
        %v498 = vsel %vm463, %v458, 0
        %v501 = vsel %vm463, %v459, 0
        %v504 = vsel %vm463, %v460, 0
        %v507 = vsel %vm463, %v461, 0
        %v510 = vsel %vm463, %v462, 0
        %vm512 = vcmask 1043456
        %v514 = vsel %vm512, %v377, 0
        %516 = vmatprep.subr.bf16.mxu0 0
        %517 = vmatpush1.bf16.msra.mxu0 %v514
        %518 = vmatprep.subr.bf16.mxu0 0
        %519 = vmatpush1.bf16.msra.mxu0 0
        %520 = vmatprep.subr.bf16.mxu0 0
        %521 = vmatpush1.bf16.msra.mxu0 0
        %522 = vmatprep.subr.bf16.mxu0 0
        %523 = vmatpush1.bf16.msra.mxu0 0
        %524 = vmatprep.subr.bf16.mxu0 0
        %525 = vmatpush1.bf16.msra.mxu0 0
        %526 = vmatprep.subr.bf16.mxu0 0
        %527 = vmatpush1.bf16.msra.mxu0 0
        %528 = vmatprep.subr.bf16.mxu0 0
        %529 = vmatpush1.bf16.msra.mxu0 0
        %530 = vmatprep.subr.bf16.mxu0 0
        %531 = vmatpush1.bf16.msra.mxu0 0
        %532 = vmatprep.subr.bf16.mxu0 0
        %533 = vmatpush1.bf16.msra.mxu0 0
        %534 = vmatprep.subr.bf16.mxu0 0
        %535 = vmatpush1.bf16.msra.mxu0 0
        %536 = vmatprep.subr.bf16.mxu0 0
        %537 = vmatpush1.bf16.msra.mxu0 0
        %538 = vmatprep.subr.bf16.mxu0 0
        %539 = vmatpush1.bf16.msra.mxu0 0
        %540 = vmatprep.subr.bf16.mxu0 0
        %541 = vmatpush1.bf16.msra.mxu0 0
        %542 = vmatprep.subr.bf16.mxu0 0
        %543 = vmatpush1.bf16.msra.mxu0 0
        %544 = vmatprep.subr.bf16.mxu0 0
        %545 = vmatpush1.bf16.msra.mxu0 0
        %546 = vmatprep.subr.bf16.mxu0 0
        %547 = vmatpush1.bf16.msra.mxu0 0
        %548 = vmatprep.mubr.bf16.mxu0 0
        %549 = vmatmul.mubr.bf16.gmra.mrb[0].mxu0 %v465
        %v550 = vpop.f32.mrb[0].mxu0
        %v551 = vadd.f32 %v382, %v550
        %v552 = vpop.f32.mrb[0].mxu0
        %v553 = vpop.f32.mrb[0].mxu0
        %v554 = vadd.f32 %v382, %v553
        %v555 = vpop.f32.mrb[0].mxu0
        %556 = vmatprep.mubr.bf16.mxu0 0
        %557 = vmatmul.mubr.bf16.gmra.mrb[0].mxu0 %v468
        %v558 = vpop.f32.mrb[0].mxu0
        %v559 = vadd.f32 %v382, %v558
        %v560 = vpop.f32.mrb[0].mxu0
        %v561 = vpop.f32.mrb[0].mxu0
        %v562 = vadd.f32 %v382, %v561
        %v563 = vpop.f32.mrb[0].mxu0
        %564 = vmatprep.mubr.bf16.mxu0 0
        %565 = vmatmul.mubr.bf16.gmra.mrb[0].mxu0 %v471
        %v566 = vpop.f32.mrb[0].mxu0
        %v567 = vadd.f32 %v382, %v566
        %v568 = vpop.f32.mrb[0].mxu0
        %v569 = vpop.f32.mrb[0].mxu0
        %v570 = vadd.f32 %v382, %v569
        %v571 = vpop.f32.mrb[0].mxu0
        %572 = vmatprep.mubr.bf16.mxu0 0
        %573 = vmatmul.mubr.bf16.gmra.mrb[0].mxu0 %v474
        %v574 = vpop.f32.mrb[0].mxu0
        %v575 = vadd.f32 %v382, %v574
        %v576 = vpop.f32.mrb[0].mxu0
        %v577 = vpop.f32.mrb[0].mxu0
        %v578 = vadd.f32 %v382, %v577
        %v579 = vpop.f32.mrb[0].mxu0
        %580 = vmatprep.mubr.bf16.mxu0 0
        %581 = vmatmul.mubr.bf16.gmra.mrb[0].mxu0 %v477
        %v582 = vpop.f32.mrb[0].mxu0
        %v583 = vadd.f32 %v382, %v582
        %v584 = vpop.f32.mrb[0].mxu0
        %v585 = vpop.f32.mrb[0].mxu0
        %v586 = vadd.f32 %v382, %v585
        %v587 = vpop.f32.mrb[0].mxu0
        %588 = vmatprep.mubr.bf16.mxu0 0
        %589 = vmatmul.mubr.bf16.gmra.mrb[0].mxu0 %v480
        %v590 = vpop.f32.mrb[0].mxu0
        %v591 = vadd.f32 %v382, %v590
        %v592 = vpop.f32.mrb[0].mxu0
        %v593 = vpop.f32.mrb[0].mxu0
        %v594 = vadd.f32 %v382, %v593
        %v595 = vpop.f32.mrb[0].mxu0
        %596 = vmatprep.mubr.bf16.mxu0 0
        %597 = vmatmul.mubr.bf16.gmra.mrb[0].mxu0 %v483
        %v598 = vpop.f32.mrb[0].mxu0
        %v599 = vadd.f32 %v382, %v598
        %v600 = vpop.f32.mrb[0].mxu0
        %v601 = vpop.f32.mrb[0].mxu0
        %v602 = vadd.f32 %v382, %v601
        %v603 = vpop.f32.mrb[0].mxu0
        %604 = vmatprep.mubr.bf16.mxu0 0
        %605 = vmatmul.mubr.bf16.gmra.mrb[0].mxu0 %v486
        %v606 = vpop.f32.mrb[0].mxu0
        %v607 = vadd.f32 %v382, %v606
        %v608 = vpop.f32.mrb[0].mxu0
        %v609 = vpop.f32.mrb[0].mxu0
        %v610 = vadd.f32 %v382, %v609
        %v611 = vpop.f32.mrb[0].mxu0
        %612 = vmatprep.mubr.bf16.mxu0 0
        %613 = vmatmul.mubr.bf16.gmra.mrb[0].mxu0 %v489
        %v614 = vpop.f32.mrb[0].mxu0
        %v615 = vadd.f32 %v382, %v614
        %v616 = vpop.f32.mrb[0].mxu0
        %v617 = vpop.f32.mrb[0].mxu0
        %v618 = vadd.f32 %v382, %v617
        %v619 = vpop.f32.mrb[0].mxu0
        %620 = vmatprep.mubr.bf16.mxu0 0
        %621 = vmatmul.mubr.bf16.gmra.mrb[0].mxu0 %v492
        %v622 = vpop.f32.mrb[0].mxu0
        %v623 = vadd.f32 %v382, %v622
        %v624 = vpop.f32.mrb[0].mxu0
        %v625 = vpop.f32.mrb[0].mxu0
        %v626 = vadd.f32 %v382, %v625
        %v627 = vpop.f32.mrb[0].mxu0
        %628 = vmatprep.mubr.bf16.mxu0 0
        %629 = vmatmul.mubr.bf16.gmra.mrb[0].mxu0 %v495
        %v630 = vpop.f32.mrb[0].mxu0
        %v631 = vadd.f32 %v382, %v630
        %v632 = vpop.f32.mrb[0].mxu0
        %v633 = vpop.f32.mrb[0].mxu0
        %v634 = vadd.f32 %v382, %v633
        %v635 = vpop.f32.mrb[0].mxu0
        %636 = vmatprep.mubr.bf16.mxu0 0
        %637 = vmatmul.mubr.bf16.gmra.mrb[0].mxu0 %v498
        %v638 = vpop.f32.mrb[0].mxu0
        %v639 = vadd.f32 %v382, %v638
        %v640 = vpop.f32.mrb[0].mxu0
        %v641 = vpop.f32.mrb[0].mxu0
        %v642 = vadd.f32 %v382, %v641
        %v643 = vpop.f32.mrb[0].mxu0
        %644 = vmatprep.mubr.bf16.mxu0 0
        %645 = vmatmul.mubr.bf16.gmra.mrb[0].mxu0 %v501
        %v646 = vpop.f32.mrb[0].mxu0
        %v647 = vadd.f32 %v382, %v646
        %v648 = vpop.f32.mrb[0].mxu0
        %v649 = vpop.f32.mrb[0].mxu0
        %v650 = vadd.f32 %v382, %v649
        %v651 = vpop.f32.mrb[0].mxu0
        %652 = vmatprep.mubr.bf16.mxu0 0
        %653 = vmatmul.mubr.bf16.gmra.mrb[0].mxu0 %v504
        %v654 = vpop.f32.mrb[0].mxu0
        %v655 = vadd.f32 %v382, %v654
        %v656 = vpop.f32.mrb[0].mxu0
        %v657 = vpop.f32.mrb[0].mxu0
        %v658 = vadd.f32 %v382, %v657
        %v659 = vpop.f32.mrb[0].mxu0
        %660 = vmatprep.mubr.bf16.mxu0 0
        %661 = vmatmul.mubr.bf16.gmra.mrb[0].mxu0 %v507
        %v662 = vpop.f32.mrb[0].mxu0
        %v663 = vadd.f32 %v382, %v662
        %v664 = vpop.f32.mrb[0].mxu0
        %v665 = vpop.f32.mrb[0].mxu0
        %v666 = vadd.f32 %v382, %v665
        %v667 = vpop.f32.mrb[0].mxu0
        %668 = vmatprep.mubr.bf16.mxu0 0
        %669 = vmatmul.mubr.bf16.gmra.mrb[0].mxu0 %v510
        %v670 = vpop.f32.mrb[0].mxu0
        %v671 = vadd.f32 %v382, %v670
        %v672 = vpop.f32.mrb[0].mxu0
        %v673 = vpop.f32.mrb[0].mxu0
        %v674 = vadd.f32 %v382, %v673
        %v675 = vpop.f32.mrb[0].mxu0
        %676 = vdwg.mxu0
        %v677 = vmax.f32 %v551, 0.0
        %v678 = vmax.f32 %v554, 0.0
        %v679 = vmax.f32 %v559, 0.0
        %v680 = vmax.f32 %v562, 0.0
        %v681 = vmax.f32 %v567, 0.0
        %v682 = vmax.f32 %v570, 0.0
        %v683 = vmax.f32 %v575, 0.0
        %v684 = vmax.f32 %v578, 0.0
        %v685 = vmax.f32 %v583, 0.0
        %v686 = vmax.f32 %v586, 0.0
        %v687 = vmax.f32 %v591, 0.0
        %v688 = vmax.f32 %v594, 0.0
        %v689 = vmax.f32 %v599, 0.0
        %v690 = vmax.f32 %v602, 0.0
        %v691 = vmax.f32 %v607, 0.0
        %v692 = vmax.f32 %v610, 0.0
        %v693 = vmax.f32 %v615, 0.0
        %v694 = vmax.f32 %v618, 0.0
        %v695 = vmax.f32 %v623, 0.0
        %v696 = vmax.f32 %v626, 0.0
        %v697 = vmax.f32 %v631, 0.0
        %v698 = vmax.f32 %v634, 0.0
        %v699 = vmax.f32 %v639, 0.0
        %v700 = vmax.f32 %v642, 0.0
        %v701 = vmax.f32 %v647, 0.0
        %v702 = vmax.f32 %v650, 0.0
        %v703 = vmax.f32 %v655, 0.0
        %v704 = vmax.f32 %v658, 0.0
        %v705 = vmax.f32 %v663, 0.0
        %v706 = vmax.f32 %v666, 0.0
        %v707 = vmax.f32 %v671, 0.0
        %v708 = vmax.f32 %v674, 0.0
        %v709 = vpack.c.bf16 %v678, %v677
        %v710 = vpack.c.bf16 %v680, %v679
        %v711 = vpack.c.bf16 %v682, %v681
        %v712 = vpack.c.bf16 %v684, %v683
        %v713 = vpack.c.bf16 %v686, %v685
        %v714 = vpack.c.bf16 %v688, %v687
        %v715 = vpack.c.bf16 %v690, %v689
        %v716 = vpack.c.bf16 %v692, %v691
        %v717 = vpack.c.bf16 %v694, %v693
        %v718 = vpack.c.bf16 %v696, %v695
        %v719 = vpack.c.bf16 %v698, %v697
        %v720 = vpack.c.bf16 %v700, %v699
        %v721 = vpack.c.bf16 %v702, %v701
        %v722 = vpack.c.bf16 %v704, %v703
        %v723 = vpack.c.bf16 %v706, %v705
        %v724 = vpack.c.bf16 %v708, %v707
        %v725 = vld [vmem:[%s3] sm:$0xf]
        %v726 = vld [vmem:[%s3 + $0x4] sm:$0xf]
        %v727 = vld [vmem:[%s3 + $0x8] sm:$0xf]
        %v728 = vld [vmem:[%s3 + $0xc] sm:$0xf]
        %v729 = vld [vmem:[%s3 + $0x10] sm:$0xf]
        %v730 = vld [vmem:[%s3 + $0x14] sm:$0xf]
        %v731 = vld [vmem:[%s3 + $0x18] sm:$0xf]
        %v732 = vld [vmem:[%s3 + $0x1c] sm:$0xf]
        %v733 = vld [vmem:[%s3 + $0x20] sm:$0xf]
        %v734 = vld [vmem:[%s3 + $0x24] sm:$0xf]
        %v735 = vld [vmem:[%s3 + $0x28] sm:$0xf]
        %v736 = vld [vmem:[%s3 + $0x2c] sm:$0xf]
        %v737 = vld [vmem:[%s3 + $0x30] sm:$0xf]
        %v738 = vld [vmem:[%s3 + $0x34] sm:$0xf]
        %v739 = vld [vmem:[%s3 + $0x38] sm:$0xf]
        %v740 = vld [vmem:[%s3 + $0x3c] sm:$0xf]
        %v741 = vld [vmem:[%s2 + $0x1] sm:$0x1]
        %v742 = vlaneseq
        %v743 = vshrl.u32 %v742, 7
        %v744 = vsub.s32 0, %v743
        %v745 = vrot.slane %v741, %v744
        %v762 = vunpack.c.l.b16 %v725
        %v763 = vunpack.c.l.b16 %v726
        %v764 = vunpack.c.l.b16 %v727
        %v765 = vunpack.c.l.b16 %v728
        %v766 = vunpack.c.l.b16 %v729
        %v767 = vunpack.c.l.b16 %v730
        %v768 = vunpack.c.l.b16 %v731
        %v769 = vunpack.c.l.b16 %v732
        %v770 = vunpack.c.l.b16 %v733
        %v771 = vunpack.c.l.b16 %v734
        %v772 = vunpack.c.l.b16 %v735
        %v773 = vunpack.c.l.b16 %v736
        %v774 = vunpack.c.l.b16 %v737
        %v775 = vunpack.c.l.b16 %v738
        %v776 = vunpack.c.l.b16 %v739
        %v777 = vunpack.c.l.b16 %v740
        %v778 = vpack.c.b16 %v763, %v762
        %v779 = vpack.c.b16 %v765, %v764
        %v780 = vpack.c.b16 %v767, %v766
        %v781 = vpack.c.b16 %v769, %v768
        %v782 = vpack.c.b16 %v771, %v770
        %v783 = vpack.c.b16 %v773, %v772
        %v784 = vpack.c.b16 %v775, %v774
        %v785 = vpack.c.b16 %v777, %v776
        %794 = vmatprep.subr.bf16.mxu0 0
        %795 = vmatpush1.bf16.msra.mxu0 %v778
        %796 = vmatprep.subr.bf16.mxu0 0
        %797 = vmatpush1.bf16.msra.mxu0 %v779
        %798 = vmatprep.subr.bf16.mxu0 0
        %799 = vmatpush1.bf16.msra.mxu0 %v780
        %800 = vmatprep.subr.bf16.mxu0 0
        %801 = vmatpush1.bf16.msra.mxu0 %v781
        %802 = vmatprep.subr.bf16.mxu0 0
        %803 = vmatpush1.bf16.msra.mxu0 %v782
        %804 = vmatprep.subr.bf16.mxu0 0
        %805 = vmatpush1.bf16.msra.mxu0 %v783
        %806 = vmatprep.subr.bf16.mxu0 0
        %807 = vmatpush1.bf16.msra.mxu0 %v784
        %808 = vmatprep.subr.bf16.mxu0 0
        %809 = vmatpush1.bf16.msra.mxu0 %v785
        %810 = vmatprep.subr.bf16.mxu0 0
        %811 = vmatpush1.bf16.msra.mxu0 0
        %812 = vmatprep.subr.bf16.mxu0 0
        %813 = vmatpush1.bf16.msra.mxu0 0
        %814 = vmatprep.subr.bf16.mxu0 0
        %815 = vmatpush1.bf16.msra.mxu0 0
        %816 = vmatprep.subr.bf16.mxu0 0
        %817 = vmatpush1.bf16.msra.mxu0 0
        %818 = vmatprep.subr.bf16.mxu0 0
        %819 = vmatpush1.bf16.msra.mxu0 0
        %820 = vmatprep.subr.bf16.mxu0 0
        %821 = vmatpush1.bf16.msra.mxu0 0
        %822 = vmatprep.subr.bf16.mxu0 0
        %823 = vmatpush1.bf16.msra.mxu0 0
        %824 = vmatprep.subr.bf16.mxu0 0
        %825 = vmatpush1.bf16.msra.mxu0 0
        %826 = vmatprep.mubr.bf16.mxu0 0
        %827 = vmatmul.mubr.bf16.gmra.mrb[0].mxu0 %v709
        %v828 = vpop.f32.mrb[0].mxu0
        %v829 = vadd.f32 %v745, %v828
        %v830 = vpop.f32.mrb[0].mxu0
        %v831 = vpop.f32.mrb[0].mxu0
        %v832 = vadd.f32 %v745, %v831
        %v833 = vpop.f32.mrb[0].mxu0
        %834 = vmatprep.mubr.bf16.mxu0 0
        %835 = vmatmul.mubr.bf16.gmra.mrb[0].mxu0 %v710
        %v836 = vpop.f32.mrb[0].mxu0
        %v837 = vadd.f32 %v745, %v836
        %v838 = vpop.f32.mrb[0].mxu0
        %v839 = vpop.f32.mrb[0].mxu0
        %v840 = vadd.f32 %v745, %v839
        %v841 = vpop.f32.mrb[0].mxu0
        %842 = vmatprep.mubr.bf16.mxu0 0
        %843 = vmatmul.mubr.bf16.gmra.mrb[0].mxu0 %v711
        %v844 = vpop.f32.mrb[0].mxu0
        %v845 = vadd.f32 %v745, %v844
        %v846 = vpop.f32.mrb[0].mxu0
        %v847 = vpop.f32.mrb[0].mxu0
        %v848 = vadd.f32 %v745, %v847
        %v849 = vpop.f32.mrb[0].mxu0
        %850 = vmatprep.mubr.bf16.mxu0 0
        %851 = vmatmul.mubr.bf16.gmra.mrb[0].mxu0 %v712
        %v852 = vpop.f32.mrb[0].mxu0
        %v853 = vadd.f32 %v745, %v852
        %v854 = vpop.f32.mrb[0].mxu0
        %v855 = vpop.f32.mrb[0].mxu0
        %v856 = vadd.f32 %v745, %v855
        %v857 = vpop.f32.mrb[0].mxu0
        %858 = vmatprep.mubr.bf16.mxu0 0
        %859 = vmatmul.mubr.bf16.gmra.mrb[0].mxu0 %v713
        %v860 = vpop.f32.mrb[0].mxu0
        %v861 = vadd.f32 %v745, %v860
        %v862 = vpop.f32.mrb[0].mxu0
        %v863 = vpop.f32.mrb[0].mxu0
        %v864 = vadd.f32 %v745, %v863
        %v865 = vpop.f32.mrb[0].mxu0
        %866 = vmatprep.mubr.bf16.mxu0 0
        %867 = vmatmul.mubr.bf16.gmra.mrb[0].mxu0 %v714
        %v868 = vpop.f32.mrb[0].mxu0
        %v869 = vadd.f32 %v745, %v868
        %v870 = vpop.f32.mrb[0].mxu0
        %v871 = vpop.f32.mrb[0].mxu0
        %v872 = vadd.f32 %v745, %v871
        %v873 = vpop.f32.mrb[0].mxu0
        %874 = vmatprep.mubr.bf16.mxu0 0
        %875 = vmatmul.mubr.bf16.gmra.mrb[0].mxu0 %v715
        %v876 = vpop.f32.mrb[0].mxu0
        %v877 = vadd.f32 %v745, %v876
        %v878 = vpop.f32.mrb[0].mxu0
        %v879 = vpop.f32.mrb[0].mxu0
        %v880 = vadd.f32 %v745, %v879
        %v881 = vpop.f32.mrb[0].mxu0
        %882 = vmatprep.mubr.bf16.mxu0 0
        %883 = vmatmul.mubr.bf16.gmra.mrb[0].mxu0 %v716
        %v884 = vpop.f32.mrb[0].mxu0
        %v885 = vadd.f32 %v745, %v884
        %v886 = vpop.f32.mrb[0].mxu0
        %v887 = vpop.f32.mrb[0].mxu0
        %v888 = vadd.f32 %v745, %v887
        %v889 = vpop.f32.mrb[0].mxu0
        %890 = vmatprep.mubr.bf16.mxu0 0
        %891 = vmatmul.mubr.bf16.gmra.mrb[0].mxu0 %v717
        %v892 = vpop.f32.mrb[0].mxu0
        %v893 = vadd.f32 %v745, %v892
        %v894 = vpop.f32.mrb[0].mxu0
        %v895 = vpop.f32.mrb[0].mxu0
        %v896 = vadd.f32 %v745, %v895
        %v897 = vpop.f32.mrb[0].mxu0
        %898 = vmatprep.mubr.bf16.mxu0 0
        %899 = vmatmul.mubr.bf16.gmra.mrb[0].mxu0 %v718
        %v900 = vpop.f32.mrb[0].mxu0
        %v901 = vadd.f32 %v745, %v900
        %v902 = vpop.f32.mrb[0].mxu0
        %v903 = vpop.f32.mrb[0].mxu0
        %v904 = vadd.f32 %v745, %v903
        %v905 = vpop.f32.mrb[0].mxu0
        %906 = vmatprep.mubr.bf16.mxu0 0
        %907 = vmatmul.mubr.bf16.gmra.mrb[0].mxu0 %v719
        %v908 = vpop.f32.mrb[0].mxu0
        %v909 = vadd.f32 %v745, %v908
        %v910 = vpop.f32.mrb[0].mxu0
        %v911 = vpop.f32.mrb[0].mxu0
        %v912 = vadd.f32 %v745, %v911
        %v913 = vpop.f32.mrb[0].mxu0
        %914 = vmatprep.mubr.bf16.mxu0 0
        %915 = vmatmul.mubr.bf16.gmra.mrb[0].mxu0 %v720
        %v916 = vpop.f32.mrb[0].mxu0
        %v917 = vadd.f32 %v745, %v916
        %v918 = vpop.f32.mrb[0].mxu0
        %v919 = vpop.f32.mrb[0].mxu0
        %v920 = vadd.f32 %v745, %v919
        %v921 = vpop.f32.mrb[0].mxu0
        %922 = vmatprep.mubr.bf16.mxu0 0
        %923 = vmatmul.mubr.bf16.gmra.mrb[0].mxu0 %v721
        %v924 = vpop.f32.mrb[0].mxu0
        %v925 = vadd.f32 %v745, %v924
        %v926 = vpop.f32.mrb[0].mxu0
        %v927 = vpop.f32.mrb[0].mxu0
        %v928 = vadd.f32 %v745, %v927
        %v929 = vpop.f32.mrb[0].mxu0
        %930 = vmatprep.mubr.bf16.mxu0 0
        %931 = vmatmul.mubr.bf16.gmra.mrb[0].mxu0 %v722
        %v932 = vpop.f32.mrb[0].mxu0
        %v933 = vadd.f32 %v745, %v932
        %v934 = vpop.f32.mrb[0].mxu0
        %v935 = vpop.f32.mrb[0].mxu0
        %v936 = vadd.f32 %v745, %v935
        %v937 = vpop.f32.mrb[0].mxu0
        %938 = vmatprep.mubr.bf16.mxu0 0
        %939 = vmatmul.mubr.bf16.gmra.mrb[0].mxu0 %v723
        %v940 = vpop.f32.mrb[0].mxu0
        %v941 = vadd.f32 %v745, %v940
        %v942 = vpop.f32.mrb[0].mxu0
        %v943 = vpop.f32.mrb[0].mxu0
        %v944 = vadd.f32 %v745, %v943
        %v945 = vpop.f32.mrb[0].mxu0
        %946 = vmatprep.mubr.bf16.mxu0 0
        %947 = vmatmul.mubr.bf16.gmra.mrb[0].mxu0 %v724
        %v948 = vpop.f32.mrb[0].mxu0
        %v949 = vadd.f32 %v745, %v948
        %v950 = vpop.f32.mrb[0].mxu0
        %v951 = vpop.f32.mrb[0].mxu0
        %v952 = vadd.f32 %v745, %v951
        %v953 = vpop.f32.mrb[0].mxu0
        %954 = vdwg.mxu0
        %v955 = vld [vmem:[#allocation2] sm:$0xff]
        %v956 = vld [vmem:[#allocation2 + $0x8] sm:$0xff]
        %v957 = vld [vmem:[#allocation2 + $0x10] sm:$0xff]
        %v958 = vld [vmem:[#allocation2 + $0x18] sm:$0xff]
        %v959 = vld [vmem:[#allocation2 + $0x20] sm:$0xff]
        %v960 = vld [vmem:[#allocation2 + $0x28] sm:$0xff]
        %v961 = vld [vmem:[#allocation2 + $0x30] sm:$0xff]
        %v962 = vld [vmem:[#allocation2 + $0x38] sm:$0xff]
        %v963 = vld [vmem:[%s291] sm:$0xff]
        %v964 = vld [vmem:[%s291 + $0x8] sm:$0xff]
        %v965 = vld [vmem:[%s291 + $0x10] sm:$0xff]
        %v966 = vld [vmem:[%s291 + $0x18] sm:$0xff]
        %v967 = vld [vmem:[%s291 + $0x20] sm:$0xff]
        %v968 = vld [vmem:[%s291 + $0x28] sm:$0xff]
        %v969 = vld [vmem:[%s291 + $0x30] sm:$0xff]
        %v970 = vld [vmem:[%s291 + $0x38] sm:$0xff]
        %v971 = vpack.c.bf16 %v832, %v829
        %v972 = vpack.c.bf16 %v840, %v837
        %v973 = vpack.c.bf16 %v848, %v845
        %v974 = vpack.c.bf16 %v856, %v853
        %v975 = vpack.c.bf16 %v864, %v861
        %v976 = vpack.c.bf16 %v872, %v869
        %v977 = vpack.c.bf16 %v880, %v877
        %v978 = vpack.c.bf16 %v888, %v885
        %v979 = vpack.c.bf16 %v896, %v893
        %v980 = vpack.c.bf16 %v904, %v901
        %v981 = vpack.c.bf16 %v912, %v909
        %v982 = vpack.c.bf16 %v920, %v917
        %v983 = vpack.c.bf16 %v928, %v925
        %v984 = vpack.c.bf16 %v936, %v933
        %v985 = vpack.c.bf16 %v944, %v941
        %v986 = vpack.c.bf16 %v952, %v949
        %v995 = vunpack.c.l.b16 %v963
        %v996 = vunpack.c.h.b16 %v963
        %v997 = vunpack.c.l.b16 %v964
        %v998 = vunpack.c.h.b16 %v964
        %v999 = vunpack.c.l.b16 %v965
        %v1000 = vunpack.c.h.b16 %v965
        %v1001 = vunpack.c.l.b16 %v966
        %v1002 = vunpack.c.h.b16 %v966
        %v1003 = vunpack.c.l.b16 %v967
        %v1004 = vunpack.c.h.b16 %v967
        %v1005 = vunpack.c.l.b16 %v968
        %v1006 = vunpack.c.h.b16 %v968
        %v1007 = vunpack.c.l.b16 %v969
        %v1008 = vunpack.c.h.b16 %v969
        %v1009 = vunpack.c.l.b16 %v970
        %v1010 = vunpack.c.h.b16 %v970
        %v1011 = vpack.c.b16 %v997, %v995
        %v1012 = vpack.c.b16 %v998, %v996
        %v1013 = vpack.c.b16 %v1001, %v999
        %v1014 = vpack.c.b16 %v1002, %v1000
        %v1015 = vpack.c.b16 %v1005, %v1003
        %v1016 = vpack.c.b16 %v1006, %v1004
        %v1017 = vpack.c.b16 %v1009, %v1007
        %v1018 = vpack.c.b16 %v1010, %v1008
        %1027 = vmatprep.subr.bf16.mxu0 0
        %1028 = vmatpush1.bf16.msra.mxu0 %v971
        %1029 = vmatprep.subr.bf16.mxu0 0
        %1030 = vmatpush1.bf16.msra.mxu0 %v972
        %1031 = vmatprep.subr.bf16.mxu0 0
        %1032 = vmatpush1.bf16.msra.mxu0 %v973
        %1033 = vmatprep.subr.bf16.mxu0 0
        %1034 = vmatpush1.bf16.msra.mxu0 %v974
        %1035 = vmatprep.subr.bf16.mxu0 0
        %1036 = vmatpush1.bf16.msra.mxu0 %v975
        %1037 = vmatprep.subr.bf16.mxu0 0
        %1038 = vmatpush1.bf16.msra.mxu0 %v976
        %1039 = vmatprep.subr.bf16.mxu0 0
        %1040 = vmatpush1.bf16.msra.mxu0 %v977
        %1041 = vmatprep.subr.bf16.mxu0 0
        %1042 = vmatpush1.bf16.msra.mxu0 %v978
        %1043 = vmatprep.subr.bf16.mxu0 0
        %1044 = vmatpush1.bf16.msra.mxu0 %v979
        %1045 = vmatprep.subr.bf16.mxu0 0
        %1046 = vmatpush1.bf16.msra.mxu0 %v980
        %1047 = vmatprep.subr.bf16.mxu0 0
        %1048 = vmatpush1.bf16.msra.mxu0 %v981
        %1049 = vmatprep.subr.bf16.mxu0 0
        %1050 = vmatpush1.bf16.msra.mxu0 %v982
        %1051 = vmatprep.subr.bf16.mxu0 0
        %1052 = vmatpush1.bf16.msra.mxu0 %v983
        %1053 = vmatprep.subr.bf16.mxu0 0
        %1054 = vmatpush1.bf16.msra.mxu0 %v984
        %1055 = vmatprep.subr.bf16.mxu0 0
        %1056 = vmatpush1.bf16.msra.mxu0 %v985
        %1057 = vmatprep.subr.bf16.mxu0 0
        %1058 = vmatpush1.bf16.msra.mxu0 %v986
        %1059 = vmatprep.mubr.bf16.mxu0 %v1012
        %1060 = vmatmul.mubr.bf16.gmra.mrb[0].mxu0 %v1011
        %v1061 = vpop.f32.mrb[0].mxu0
        %v1062 = vadd.f32 0.0, %v1061
        %v1063 = vpop.f32.mrb[0].mxu0
        %v1064 = vpop.f32.mrb[0].mxu0
        %v1065 = vadd.f32 0.0, %v1064
        %v1066 = vpop.f32.mrb[0].mxu0
        %1067 = vmatprep.mubr.bf16.mxu0 %v1014
        %1068 = vmatmul.mubr.bf16.gmra.mrb[0].mxu0 %v1013
        %v1069 = vpop.f32.mrb[0].mxu0
        %v1070 = vadd.f32 0.0, %v1069
        %v1071 = vpop.f32.mrb[0].mxu0
        %v1072 = vpop.f32.mrb[0].mxu0
        %v1073 = vadd.f32 0.0, %v1072
        %v1074 = vpop.f32.mrb[0].mxu0
        %1075 = vmatprep.mubr.bf16.mxu0 %v1016
        %1076 = vmatmul.mubr.bf16.gmra.mrb[0].mxu0 %v1015
        %v1077 = vpop.f32.mrb[0].mxu0
        %v1078 = vadd.f32 0.0, %v1077
        %v1079 = vpop.f32.mrb[0].mxu0
        %v1080 = vpop.f32.mrb[0].mxu0
        %v1081 = vadd.f32 0.0, %v1080
        %v1082 = vpop.f32.mrb[0].mxu0
        %1083 = vmatprep.mubr.bf16.mxu0 %v1018
        %1084 = vmatmul.mubr.bf16.gmra.mrb[0].mxu0 %v1017
        %v1085 = vpop.f32.mrb[0].mxu0
        %v1086 = vadd.f32 0.0, %v1085
        %v1087 = vpop.f32.mrb[0].mxu0
        %v1088 = vpop.f32.mrb[0].mxu0
        %v1089 = vadd.f32 0.0, %v1088
        %v1090 = vpop.f32.mrb[0].mxu0
        %1091 = vdwg.mxu0
        %v1092 = vadd.f32 %v955, %v1062
        %v1093 = vadd.f32 %v956, %v1065
        %v1094 = vadd.f32 %v957, %v1070
        %v1095 = vadd.f32 %v958, %v1073
        %v1096 = vadd.f32 %v959, %v1078
        %v1097 = vadd.f32 %v960, %v1081
        %v1098 = vadd.f32 %v961, %v1086
        %v1099 = vadd.f32 %v962, %v1089
        %1100 = vst [vmem:[#allocation2] sm:$0xff] %v1092
        %1101 = vst [vmem:[#allocation2 + $0x8] sm:$0xff] %v1093
        %1102 = vst [vmem:[#allocation2 + $0x10] sm:$0xff] %v1094
        %1103 = vst [vmem:[#allocation2 + $0x18] sm:$0xff] %v1095
        %1104 = vst [vmem:[#allocation2 + $0x20] sm:$0xff] %v1096
        %1105 = vst [vmem:[#allocation2 + $0x28] sm:$0xff] %v1097
        %1106 = vst [vmem:[#allocation2 + $0x30] sm:$0xff] %v1098
        %1107 = vst [vmem:[#allocation2 + $0x38] sm:$0xff] %v1099
        // Predicated region
        $region83: #{tpu_custom_call.1} parent=73 // pred_check
          %p1108 = pneg %p333
        $region84: #{tpu_custom_call.1} parent=73 // pred_check_branch
          %1110 = sbr.rel (%p1108) target = $region86
        $region85: #{tpu_custom_call.1} parent=73 // pred_region
          %v1111 = vld [vmem:[#allocation2] sm:$0xff]
          %v1112 = vld [vmem:[#allocation2 + $0x8] sm:$0xff]
          %v1113 = vld [vmem:[#allocation2 + $0x10] sm:$0xff]
          %v1114 = vld [vmem:[#allocation2 + $0x18] sm:$0xff]
          %v1115 = vld [vmem:[#allocation2 + $0x20] sm:$0xff]
          %v1116 = vld [vmem:[#allocation2 + $0x28] sm:$0xff]
          %v1117 = vld [vmem:[#allocation2 + $0x30] sm:$0xff]
          %v1118 = vld [vmem:[#allocation2 + $0x38] sm:$0xff]
          %v1119 = vpack.c.bf16 %v1112, %v1111
          %v1120 = vpack.c.bf16 %v1114, %v1113
          %v1121 = vpack.c.bf16 %v1116, %v1115
          %v1122 = vpack.c.bf16 %v1118, %v1117
          %v1127 = vunpack.c.l.b16 %v1119
          %v1128 = vunpack.c.h.b16 %v1119
          %v1129 = vunpack.c.l.b16 %v1120
          %v1130 = vunpack.c.h.b16 %v1120
          %v1131 = vunpack.c.l.b16 %v1121
          %v1132 = vunpack.c.h.b16 %v1121
          %v1133 = vunpack.c.l.b16 %v1122
          %v1134 = vunpack.c.h.b16 %v1122
          %v1135 = vpack.c.b16 %v1127, %v1127
          %v1136 = vpack.c.b16 %v1128, %v1128
          %v1137 = vpack.c.b16 %v1129, %v1129
          %v1138 = vpack.c.b16 %v1130, %v1130
          %v1139 = vpack.c.b16 %v1131, %v1131
          %v1140 = vpack.c.b16 %v1132, %v1132
          %v1141 = vpack.c.b16 %v1133, %v1133
          %v1142 = vpack.c.b16 %v1134, %v1134
          %1151 = vst [vmem:[%s321] sm:$0xf] %v1135
          %1152 = vst [vmem:[%s321 + $0x4] sm:$0xf] %v1136
          %1153 = vst [vmem:[%s321 + $0x8] sm:$0xf] %v1137
          %1154 = vst [vmem:[%s321 + $0xc] sm:$0xf] %v1138
          %1155 = vst [vmem:[%s321 + $0x10] sm:$0xf] %v1139
          %1156 = vst [vmem:[%s321 + $0x14] sm:$0xf] %v1140
          %1157 = vst [vmem:[%s321 + $0x18] sm:$0xf] %v1141
          %1158 = vst [vmem:[%s321 + $0x1c] sm:$0xf] %v1142
        $region86: #{tpu_custom_call.1} parent=73 // pred_fallthru
          _
        %s1159 = sand.u32 %s158, 1
        %s1160 = scalar_lea.sflag [#allocation5], %s1159
        %s1161 = sand.u32 %s158, 1
        %s1162 = smul.addr %s1161, 32
        %s1163 = scalar_lea.vmem [#allocation4], %s1162
        // Predicated region
        $region87: #{tpu_custom_call.1} parent=73 // pred_check
          %p1164 = pneg %p168
        $region88: #{tpu_custom_call.1} parent=73 // pred_check_branch
          %1166 = sbr.rel (%p1164) target = $region90
        $region89: #{tpu_custom_call.1} parent=73 // pred_region
          %s1168 = ssub.s32 512, 512
          %1169 = vsyncadd %s1160, %s1168
          %s1170 = smul.addr %s23, 8
          %s1171 = smul.addr %s1170, 64
          %s1172 = scalar_lea.hbm %s5, %s1171
          %s1173 = sshll.u32 %s1163, 4
          %s1174 = int_to_ptr.vmem [resolvable:$true] %s1173
          %1179 = dma.vmem_to_hbm [thread:$0]  %s1174, 512, %s1172, %s1160, 64, 64, 4
        $region90: #{tpu_custom_call.1} parent=73 // pred_fallthru
          _
      $region74: #{tpu_custom_call.1} parent=5 // pred_fallthru
        _
      %p1180 = scmp.le.s32.totalorder 2, %s14
      // Predicated region
      $region91: #{tpu_custom_call.1} parent=5 // pred_check
        %p1181 = pneg %p1180
      $region92: #{tpu_custom_call.1} parent=5 // pred_check_branch
        %1183 = sbr.rel (%p1181) target = $region94
      $region93: #{tpu_custom_call.1} parent=5 // pred_region
        %s1184 = ssub.s32 %s14, 2
        // Predicated region
        $region95: #{tpu_custom_call.1} parent=93 // pred_check
          %p1185 = pneg %p174
        $region96: #{tpu_custom_call.1} parent=93 // pred_check_branch
          %1187 = sbr.rel (%p1185) target = $region98
        $region97: #{tpu_custom_call.1} parent=93 // pred_region
          %s1188 = sand.u32 %s159, 1
          %s1189 = scalar_lea.sflag [#allocation5], %s1188
          %s1190 = sand.u32 %s159, 1
          %s1191 = smul.addr %s1190, 32
          %s1192 = scalar_lea.vmem [#allocation4], %s1191
          %1193 = dma.done %s1189, 512
        $region98: #{tpu_custom_call.1} parent=93 // pred_fallthru
          _
      $region94: #{tpu_custom_call.1} parent=5 // pred_fallthru
        _
    $region6: #{tpu_custom_call.1} parent=1 // loop_footer
      %s18 = sadd.s32 1, %s14
    $region7: #{tpu_custom_call.1} parent=1 // loop_footer_branch
      %13 = sbr.rel target = $region3
    $region8: #{tpu_custom_call.1} parent=1 // loop_exit
      _
    %1194 = vsyncpa [#allocation5], 1
    %s1195 = scalar_lea.sflag [#allocation5], 1
    %1196 = vsyncpa %s1195, 1

</llo_original>
